<compile_context>
chip_gen: v5e
topology: v5e:2x2
jax: 0.10.0
libtpu: 0.0.40
codegen_flags: <defaults>
</compile_context>

<pallas_src>
import math
from functools import partial

import jax
import jax.numpy as jnp
from jax import lax
from jax.experimental import pallas as pl
from jax.experimental.pallas import tpu as pltpu


def compute_axial_cos_sin(dim, end_x, end_y, theta=10000.0):
    """cos/sin of the axial RoPE angles (matches compute_axial_cis), (N, dim//2)."""
    freqs = 1.0 / theta ** (jnp.arange(0, dim, 4)[: dim // 4].astype(jnp.float32) / dim)
    t = jnp.arange(end_x * end_y, dtype=jnp.float32)
    t_x = t % end_x
    t_y = jnp.floor(t / end_x)
    ang = jnp.concatenate([jnp.outer(t_x, freqs), jnp.outer(t_y, freqs)], axis=-1)
    return jnp.cos(ang), jnp.sin(ang)


def _rope_attention_kernel(q_ref, k_ref, v_ref,
                           wq_ref, bq_ref, wk_ref, bk_ref, wv_ref, bv_ref,
                           wo_ref, bo_ref,
                           cosq_ref, sinq_ref, cosk_ref, sink_ref,
                           out_ref,
                           *, head_nums, head_dim):
    f32 = jnp.float32
    bf16 = jnp.bfloat16
    half = head_dim // 2
    scale = 1.0 / math.sqrt(head_dim)

    xq = q_ref[0]            # (Nq, Cin)  bf16
    xk = k_ref[0]            # (Nk, Ckv)  bf16
    xv = v_ref[0]            # (Nk, Ckv)  bf16

    # Full-width projections once per batch element (all heads together, MXU bf16).
    qf = jnp.dot(xq, wq_ref[...], preferred_element_type=f32) + bq_ref[...]   # (Nq, inter) f32
    kf = jnp.dot(xk, wk_ref[...], preferred_element_type=f32) + bk_ref[...]   # (Nk, inter) f32
    vf = jnp.dot(xv, wv_ref[...], preferred_element_type=f32) + bv_ref[...]   # (Nk, inter) f32

    cos_q = cosq_ref[...]    # (Nq, half) f32
    sin_q = sinq_ref[...]
    cos_k = cosk_ref[...]    # (Nk, half) f32
    sin_k = sink_ref[...]

    head_outs = []
    for h in range(head_nums):          # H is small & static -> fully unrolled
        lo = h * head_dim
        qh = qf[:, lo:lo + head_dim]    # (Nq, dh)
        kh = kf[:, lo:lo + head_dim]    # (Nk, dh)
        vh = vf[:, lo:lo + head_dim]    # (Nk, dh)

        # RoPE in the (even | odd) permuted per-head basis: direct half-split
        # complex rotation (no negated rotate-half tensor materialized).
        qe, qo = qh[:, :half], qh[:, half:]
        ke, ko = kh[:, :half], kh[:, half:]
        qh = jnp.concatenate([qe * cos_q - qo * sin_q,
                              qo * cos_q + qe * sin_q], axis=-1)
        kh = jnp.concatenate([ke * cos_k - ko * sin_k,
                              ko * cos_k + ke * sin_k], axis=-1)

        # Scaled dot-product attention; scores/softmax in f32, MXU operands bf16.
        # Contraction on the last dim of both operands ('qd,kd->qk' form).
        s = lax.dot_general(qh.astype(bf16), kh.astype(bf16),
                            (((1,), (1,)), ((), ())),
                            preferred_element_type=f32) * scale          # (Nq, Nk)
        m = jnp.max(s, axis=-1, keepdims=True)
        p = jnp.exp(s - m)
        denom = jnp.sum(p, axis=-1, keepdims=True)
        p = p * pl.reciprocal(denom, approx=True)

        head_outs.append(jnp.dot(p.astype(bf16), vh.astype(bf16),
                                 preferred_element_type=f32))            # (Nq, dh)

    # Single out-projection over all heads at once.
    o_all = jnp.concatenate(head_outs, axis=-1)                          # (Nq, inter)
    out_ref[0] = (jnp.dot(o_all.astype(bf16), wo_ref[...],
                          preferred_element_type=f32) + bo_ref[...])


def rope_attention_forward(q, k, v, params, head_nums,
                           num_k_exclude_rope=0, rope_k_repeat=False,
                           rope_theta=10000.0):
    B, Nq, Cin = q.shape
    _, Nk, Ckv = k.shape
    Wq, bq, Wk, bk, Wv, bv, Wo, bo = params
    inter = Wq.shape[0]
    H = head_nums
    dh = inter // H
    half = dh // 2
    Cout = Wo.shape[0]

    # Axial RoPE tables for the q token grid (Nq must be a perfect square).
    side = int(round(math.sqrt(Nq)))
    assert side * side == Nq, "q tokens must form a square spatial grid"
    cos, sin = compute_axial_cos_sin(dh, side, side, theta=rope_theta)   # (Nq, half)

    num_k_rope = Nk - num_k_exclude_rope
    if num_k_rope == Nq:
        cos_kr, sin_kr = cos, sin
    else:
        assert rope_k_repeat
        assert num_k_rope % Nq == 0, "rope_k_repeat requires num_k_rope % Nq == 0"
        r = num_k_rope // Nq
        cos_kr = jnp.tile(cos, (r, 1))
        sin_kr = jnp.tile(sin, (r, 1))
    # Keys excluded from RoPE get the identity rotation (cos=1, sin=0).
    cos_k = jnp.concatenate(
        [cos_kr, jnp.ones((Nk - num_k_rope, half), jnp.float32)], axis=0)
    sin_k = jnp.concatenate(
        [sin_kr, jnp.zeros((Nk - num_k_rope, half), jnp.float32)], axis=0)

    # Output-feature permutation per head: (even | odd) so the in-kernel RoPE is
    # a plain half-split rotation.  Scores q@k^T are invariant to this shared
    # q/k permutation; v / out_proj keep the natural layout.
    perm_head = jnp.concatenate([jnp.arange(0, dh, 2), jnp.arange(1, dh, 2)])
    perm = jnp.concatenate([h * dh + perm_head for h in range(H)])

    # bf16 weights & activations for the MXU; biases / RoPE tables stay f32.
    wq_t = Wq.T[:, perm].astype(jnp.bfloat16)      # (Cin, inter)
    wk_t = Wk.T[:, perm].astype(jnp.bfloat16)      # (Ckv, inter)
    wv_t = Wv.T.astype(jnp.bfloat16)               # (Ckv, inter)
    wo_t = Wo.T.astype(jnp.bfloat16)               # (inter, Cout)
    bq_r = bq[perm].reshape(1, inter)
    bk_r = bk[perm].reshape(1, inter)
    bv_r = bv.reshape(1, inter)
    bo_r = bo.reshape(1, Cout)

    q_b = q.astype(jnp.bfloat16)
    k_b = k.astype(jnp.bfloat16)
    v_b = v.astype(jnp.bfloat16)

    kernel = partial(_rope_attention_kernel, head_nums=H, head_dim=dh)

    # TODO(synk): for production SAM2 sequence lengths (Nq=4096, Nk~4k-7k) add an
    # Nk grid axis with flash-style online softmax so K/V and the score matrix
    # never need to fit VMEM at once (mandatory on v7x's 64 MiB VMEM).
    out = pl.pallas_call(
        kernel,
        out_shape=jax.ShapeDtypeStruct((B, Nq, Cout), jnp.float32),
        grid_spec=pltpu.PrefetchScalarGridSpec(
            num_scalar_prefetch=0,
            grid=(B,),
            in_specs=[
                pl.BlockSpec((1, Nq, Cin), lambda b: (b, 0, 0)),    # q
                pl.BlockSpec((1, Nk, Ckv), lambda b: (b, 0, 0)),    # k
                pl.BlockSpec((1, Nk, Ckv), lambda b: (b, 0, 0)),    # v
                pl.BlockSpec((Cin, inter), lambda b: (0, 0)),       # Wq (resident)
                pl.BlockSpec((1, inter),   lambda b: (0, 0)),       # bq
                pl.BlockSpec((Ckv, inter), lambda b: (0, 0)),       # Wk
                pl.BlockSpec((1, inter),   lambda b: (0, 0)),       # bk
                pl.BlockSpec((Ckv, inter), lambda b: (0, 0)),       # Wv
                pl.BlockSpec((1, inter),   lambda b: (0, 0)),       # bv
                pl.BlockSpec((inter, Cout), lambda b: (0, 0)),      # Wo
                pl.BlockSpec((1, Cout),    lambda b: (0, 0)),       # bo
                pl.BlockSpec((Nq, half),   lambda b: (0, 0)),       # cos_q
                pl.BlockSpec((Nq, half),   lambda b: (0, 0)),       # sin_q
                pl.BlockSpec((Nk, half),   lambda b: (0, 0)),       # cos_k
                pl.BlockSpec((Nk, half),   lambda b: (0, 0)),       # sin_k
            ],
            out_specs=pl.BlockSpec((1, Nq, Cout), lambda b: (b, 0, 0)),
        ),
        compiler_params=pltpu.CompilerParams(
            dimension_semantics=("parallel",)),      # batch across TCs on v7x
    )(q_b, k_b, v_b, wq_t, bq_r, wk_t, bk_r, wv_t, bv_r, wo_t, bo_r,
      cos, sin, cos_k, sin_k)
    return out


def ref_forward(q, k, v, params, head_nums,
                num_k_exclude_rope=0, rope_k_repeat=False, rope_theta=10000.0):
    """Pure-JAX f32 reference mirroring the PyTorch (interleaved complex) math."""
    Wq, bq, Wk, bk, Wv, bv, Wo, bo = params
    B, Nq, _ = q.shape
    _, Nk, _ = k.shape
    H = head_nums
    inter = Wq.shape[0]
    dh = inter // H

    def sep(x):
        b, n, c = x.shape
        return x.reshape(b, n, H, c // H).transpose(0, 2, 1, 3)

    qp = sep(q @ Wq.T + bq)
    kp = sep(k @ Wk.T + bk)
    vp = sep(v @ Wv.T + bv)

    side = int(round(math.sqrt(Nq)))
    cos, sin = compute_axial_cos_sin(dh, side, side, theta=rope_theta)

    def rope_interleaved(x, c, s):
        xr = x.reshape(*x.shape[:-1], dh // 2, 2)
        a, b_ = xr[..., 0], xr[..., 1]
        oa = a * c - b_ * s
        ob = a * s + b_ * c
        return jnp.stack([oa, ob], axis=-1).reshape(x.shape)

    num_k_rope = Nk - num_k_exclude_rope
    qr = rope_interleaved(qp, cos, sin)
    if num_k_rope == Nq:
        ck, sk = cos, sin
    else:
        r = num_k_rope // Nq
        ck, sk = jnp.tile(cos, (r, 1)), jnp.tile(sin, (r, 1))
    kr_head = rope_interleaved(kp[:, :, :num_k_rope], ck, sk)
    kr = jnp.concatenate([kr_head, kp[:, :, num_k_rope:]], axis=2)

    scale = 1.0 / math.sqrt(dh)
    s = jnp.einsum("bhqd,bhkd->bhqk", qr, kr) * scale
    p = jax.nn.softmax(s, axis=-1)
    o = jnp.einsum("bhqk,bhkd->bhqd", p, vp)
    o = o.transpose(0, 2, 1, 3).reshape(B, Nq, inter)
    return o @ Wo.T + bo


if __name__ == "__main__":
    # Module config: inplanes=64, head_nums=2, downsample_rate=1, kv_inplanes=64
    inplanes, head_nums, kv_inplanes = 64, 2, 64
    inter = inplanes                      # downsample_rate = 1
    B, Nq, Nk = 2, 64, 64                 # Nq = 8x8 spatial grid of tokens

    key = jax.random.PRNGKey(0)
    ks = jax.random.split(key, 11)
    Wq = jax.random.normal(ks[0], (inter, inplanes), jnp.float32) * 0.05
    bq = jax.random.normal(ks[1], (inter,), jnp.float32) * 0.05
    Wk = jax.random.normal(ks[2], (inter, kv_inplanes), jnp.float32) * 0.05
    bk = jax.random.normal(ks[3], (inter,), jnp.float32) * 0.05
    Wv = jax.random.normal(ks[4], (inter, kv_inplanes), jnp.float32) * 0.05
    bv = jax.random.normal(ks[5], (inter,), jnp.float32) * 0.05
    Wo = jax.random.normal(ks[6], (inplanes, inter), jnp.float32) * 0.05
    bo = jax.random.normal(ks[7], (inplanes,), jnp.float32) * 0.05
    params = (Wq, bq, Wk, bk, Wv, bv, Wo, bo)

    q = jax.random.normal(ks[8], (B, Nq, inplanes), jnp.float32)
    k = jax.random.normal(ks[9], (B, Nk, kv_inplanes), jnp.float32)
    v = jax.random.normal(ks[10], (B, Nk, kv_inplanes), jnp.float32)

    out = rope_attention_forward(q, k, v, params, head_nums,
                                 num_k_exclude_rope=0, rope_k_repeat=False)
    out = jax.block_until_ready(out)

    ref = ref_forward(q, k, v, params, head_nums,
                      num_k_exclude_rope=0, rope_k_repeat=False)
    assert out.shape == (B, Nq, inplanes)
    # bf16 MXU operands + approx reciprocal -> tolerance relaxed vs the f32 reference.
    err = float(jnp.max(jnp.abs(out - ref)))
    rel = float(jnp.linalg.norm(out - ref) / (jnp.linalg.norm(ref) + 1e-12))
    assert err < 5e-2 and rel < 2e-2, f"mismatch vs reference: max abs {err}, rel l2 {rel}"
    print("KERNEL_OK")
</pallas_src>

<mosaic_0001>
module attributes {stable_mosaic.version = 11 : i64} {
  func.func @_rope_attention_kernel(%arg0: i32, %arg1: memref<1x64x64xbf16, #tpu.memory_space<vmem>>, %arg2: memref<1x64x64xbf16, #tpu.memory_space<vmem>>, %arg3: memref<1x64x64xbf16, #tpu.memory_space<vmem>>, %arg4: memref<64x64xbf16, #tpu.memory_space<vmem>>, %arg5: memref<1x64xf32, #tpu.memory_space<vmem>>, %arg6: memref<64x64xbf16, #tpu.memory_space<vmem>>, %arg7: memref<1x64xf32, #tpu.memory_space<vmem>>, %arg8: memref<64x64xbf16, #tpu.memory_space<vmem>>, %arg9: memref<1x64xf32, #tpu.memory_space<vmem>>, %arg10: memref<64x64xbf16, #tpu.memory_space<vmem>>, %arg11: memref<1x64xf32, #tpu.memory_space<vmem>>, %arg12: memref<64x16xf32, #tpu.memory_space<vmem>>, %arg13: memref<64x16xf32, #tpu.memory_space<vmem>>, %arg14: memref<64x16xf32, #tpu.memory_space<vmem>>, %arg15: memref<64x16xf32, #tpu.memory_space<vmem>>, %arg16: memref<1x64x64xf32, #tpu.memory_space<vmem>>) attributes {dimension_semantics = [#tpu.dimension_semantics<parallel>], iteration_bounds = array<i64: 2>, scalar_prefetch = 0 : i64, scratch_operands = 0 : i64, tpu.core_type = #tpu.core_type<tc>, window_params = [{transform_indices = @transform_0, window_bounds = array<i64: 1, 64, 64>}, {transform_indices = @transform_1, window_bounds = array<i64: 1, 64, 64>}, {transform_indices = @transform_2, window_bounds = array<i64: 1, 64, 64>}, {pipeline_mode = #tpu.pipeline_mode<synchronous>, transform_indices = @transform_3, window_bounds = array<i64: 64, 64>}, {pipeline_mode = #tpu.pipeline_mode<synchronous>, transform_indices = @transform_4, window_bounds = array<i64: 1, 64>}, {pipeline_mode = #tpu.pipeline_mode<synchronous>, transform_indices = @transform_5, window_bounds = array<i64: 64, 64>}, {pipeline_mode = #tpu.pipeline_mode<synchronous>, transform_indices = @transform_6, window_bounds = array<i64: 1, 64>}, {pipeline_mode = #tpu.pipeline_mode<synchronous>, transform_indices = @transform_7, window_bounds = array<i64: 64, 64>}, {pipeline_mode = #tpu.pipeline_mode<synchronous>, transform_indices = @transform_8, window_bounds = array<i64: 1, 64>}, {pipeline_mode = #tpu.pipeline_mode<synchronous>, transform_indices = @transform_9, window_bounds = array<i64: 64, 64>}, {pipeline_mode = #tpu.pipeline_mode<synchronous>, transform_indices = @transform_10, window_bounds = array<i64: 1, 64>}, {pipeline_mode = #tpu.pipeline_mode<synchronous>, transform_indices = @transform_11, window_bounds = array<i64: 64, 16>}, {pipeline_mode = #tpu.pipeline_mode<synchronous>, transform_indices = @transform_12, window_bounds = array<i64: 64, 16>}, {pipeline_mode = #tpu.pipeline_mode<synchronous>, transform_indices = @transform_13, window_bounds = array<i64: 64, 16>}, {pipeline_mode = #tpu.pipeline_mode<synchronous>, transform_indices = @transform_14, window_bounds = array<i64: 64, 16>}, {transform_indices = @transform_15, window_bounds = array<i64: 1, 64, 64>}]} {
    %c0 = arith.constant 0 : index
    %c0_0 = arith.constant 0 : index
    %c0_1 = arith.constant 0 : index
    %0 = vector.load %arg1[%c0, %c0_0, %c0_1] : memref<1x64x64xbf16, #tpu.memory_space<vmem>>, vector<1x64x64xbf16>
    %1 = vector.shape_cast %0 : vector<1x64x64xbf16> to vector<64x64xbf16>
    %c0_2 = arith.constant 0 : index
    %c0_3 = arith.constant 0 : index
    %c0_4 = arith.constant 0 : index
    %2 = vector.load %arg2[%c0_2, %c0_3, %c0_4] : memref<1x64x64xbf16, #tpu.memory_space<vmem>>, vector<1x64x64xbf16>
    %3 = vector.shape_cast %2 : vector<1x64x64xbf16> to vector<64x64xbf16>
    %c0_5 = arith.constant 0 : index
    %c0_6 = arith.constant 0 : index
    %c0_7 = arith.constant 0 : index
    %4 = vector.load %arg3[%c0_5, %c0_6, %c0_7] : memref<1x64x64xbf16, #tpu.memory_space<vmem>>, vector<1x64x64xbf16>
    %5 = vector.shape_cast %4 : vector<1x64x64xbf16> to vector<64x64xbf16>
    %c0_8 = arith.constant 0 : index
    %c0_9 = arith.constant 0 : index
    %6 = vector.load %arg4[%c0_8, %c0_9] : memref<64x64xbf16, #tpu.memory_space<vmem>>, vector<64x64xbf16>
    %cst = arith.constant dense<0.000000e+00> : vector<64x64xf32>
    %7 = tpu.matmul %1, %6, %cst {dimension_numbers = #tpu.dot_dimension_numbers<[1], [0], [0], [1], [0, 0, 1, 1], [], []>} : vector<64x64xbf16>, vector<64x64xbf16>, vector<64x64xf32> -> vector<64x64xf32>
    %c0_10 = arith.constant 0 : index
    %c0_11 = arith.constant 0 : index
    %8 = vector.load %arg5[%c0_10, %c0_11] : memref<1x64xf32, #tpu.memory_space<vmem>>, vector<1x64xf32>
    %9 = vector.broadcast %8 : vector<1x64xf32> to vector<64x64xf32>
    %10 = arith.addf %7, %9 : vector<64x64xf32>
    %c0_12 = arith.constant 0 : index
    %c0_13 = arith.constant 0 : index
    %11 = vector.load %arg6[%c0_12, %c0_13] : memref<64x64xbf16, #tpu.memory_space<vmem>>, vector<64x64xbf16>
    %cst_14 = arith.constant dense<0.000000e+00> : vector<64x64xf32>
    %12 = tpu.matmul %3, %11, %cst_14 {dimension_numbers = #tpu.dot_dimension_numbers<[1], [0], [0], [1], [0, 0, 1, 1], [], []>} : vector<64x64xbf16>, vector<64x64xbf16>, vector<64x64xf32> -> vector<64x64xf32>
    %c0_15 = arith.constant 0 : index
    %c0_16 = arith.constant 0 : index
    %13 = vector.load %arg7[%c0_15, %c0_16] : memref<1x64xf32, #tpu.memory_space<vmem>>, vector<1x64xf32>
    %14 = vector.broadcast %13 : vector<1x64xf32> to vector<64x64xf32>
    %15 = arith.addf %12, %14 : vector<64x64xf32>
    %c0_17 = arith.constant 0 : index
    %c0_18 = arith.constant 0 : index
    %16 = vector.load %arg8[%c0_17, %c0_18] : memref<64x64xbf16, #tpu.memory_space<vmem>>, vector<64x64xbf16>
    %cst_19 = arith.constant dense<0.000000e+00> : vector<64x64xf32>
    %17 = tpu.matmul %5, %16, %cst_19 {dimension_numbers = #tpu.dot_dimension_numbers<[1], [0], [0], [1], [0, 0, 1, 1], [], []>} : vector<64x64xbf16>, vector<64x64xbf16>, vector<64x64xf32> -> vector<64x64xf32>
    %c0_20 = arith.constant 0 : index
    %c0_21 = arith.constant 0 : index
    %18 = vector.load %arg9[%c0_20, %c0_21] : memref<1x64xf32, #tpu.memory_space<vmem>>, vector<1x64xf32>
    %19 = vector.broadcast %18 : vector<1x64xf32> to vector<64x64xf32>
    %20 = arith.addf %17, %19 : vector<64x64xf32>
    %c0_22 = arith.constant 0 : index
    %c0_23 = arith.constant 0 : index
    %21 = vector.load %arg12[%c0_22, %c0_23] : memref<64x16xf32, #tpu.memory_space<vmem>>, vector<64x16xf32>
    %c0_24 = arith.constant 0 : index
    %c0_25 = arith.constant 0 : index
    %22 = vector.load %arg13[%c0_24, %c0_25] : memref<64x16xf32, #tpu.memory_space<vmem>>, vector<64x16xf32>
    %c0_26 = arith.constant 0 : index
    %c0_27 = arith.constant 0 : index
    %23 = vector.load %arg14[%c0_26, %c0_27] : memref<64x16xf32, #tpu.memory_space<vmem>>, vector<64x16xf32>
    %c0_28 = arith.constant 0 : index
    %c0_29 = arith.constant 0 : index
    %24 = vector.load %arg15[%c0_28, %c0_29] : memref<64x16xf32, #tpu.memory_space<vmem>>, vector<64x16xf32>
    %25 = vector.extract_strided_slice %10 {offsets = [0, 0], sizes = [64, 32], strides = [1, 1]} : vector<64x64xf32> to vector<64x32xf32>
    %26 = vector.extract_strided_slice %15 {offsets = [0, 0], sizes = [64, 32], strides = [1, 1]} : vector<64x64xf32> to vector<64x32xf32>
    %27 = vector.extract_strided_slice %20 {offsets = [0, 0], sizes = [64, 32], strides = [1, 1]} : vector<64x64xf32> to vector<64x32xf32>
    %28 = vector.extract_strided_slice %25 {offsets = [0, 0], sizes = [64, 16], strides = [1, 1]} : vector<64x32xf32> to vector<64x16xf32>
    %29 = vector.extract_strided_slice %25 {offsets = [0, 16], sizes = [64, 16], strides = [1, 1]} : vector<64x32xf32> to vector<64x16xf32>
    %30 = vector.extract_strided_slice %26 {offsets = [0, 0], sizes = [64, 16], strides = [1, 1]} : vector<64x32xf32> to vector<64x16xf32>
    %31 = vector.extract_strided_slice %26 {offsets = [0, 16], sizes = [64, 16], strides = [1, 1]} : vector<64x32xf32> to vector<64x16xf32>
    %32 = arith.mulf %28, %21 : vector<64x16xf32>
    %33 = arith.mulf %29, %22 : vector<64x16xf32>
    %34 = arith.subf %32, %33 : vector<64x16xf32>
    %35 = arith.mulf %29, %21 : vector<64x16xf32>
    %36 = arith.mulf %28, %22 : vector<64x16xf32>
    %37 = arith.addf %35, %36 : vector<64x16xf32>
    %38 = tpu.concatenate %34, %37 in 1 : vector<64x16xf32>, vector<64x16xf32> -> vector<64x32xf32>
    %39 = arith.mulf %30, %23 : vector<64x16xf32>
    %40 = arith.mulf %31, %24 : vector<64x16xf32>
    %41 = arith.subf %39, %40 : vector<64x16xf32>
    %42 = arith.mulf %31, %23 : vector<64x16xf32>
    %43 = arith.mulf %30, %24 : vector<64x16xf32>
    %44 = arith.addf %42, %43 : vector<64x16xf32>
    %45 = tpu.concatenate %41, %44 in 1 : vector<64x16xf32>, vector<64x16xf32> -> vector<64x32xf32>
    %46 = arith.truncf %38 : vector<64x32xf32> to vector<64x32xbf16>
    %47 = arith.truncf %45 : vector<64x32xf32> to vector<64x32xbf16>
    %cst_30 = arith.constant dense<0.000000e+00> : vector<64x64xf32>
    %48 = tpu.matmul %46, %47, %cst_30 {dimension_numbers = #tpu.dot_dimension_numbers<[1], [1], [0], [0], [0, 0, 1, 0], [], []>} : vector<64x32xbf16>, vector<64x32xbf16>, vector<64x64xf32> -> vector<64x64xf32>
    %cst_31 = arith.constant 0.176776692 : f32
    %49 = vector.broadcast %cst_31 : f32 to vector<64x64xf32>
    %50 = arith.mulf %48, %49 : vector<64x64xf32>
    %cst_32 = arith.constant dense<0xFF800000> : vector<64xf32>
    %51 = vector.multi_reduction <maximumf>, %50, %cst_32 [1] : vector<64x64xf32> to vector<64xf32>
    %52 = vector.shape_cast %51 : vector<64xf32> to vector<64x1xf32>
    %53 = vector.broadcast %52 : vector<64x1xf32> to vector<64x64xf32>
    %54 = arith.subf %50, %53 : vector<64x64xf32>
    %55 = math.exp %54 : vector<64x64xf32>
    %cst_33 = arith.constant dense<0.000000e+00> : vector<64xf32>
    %56 = vector.multi_reduction <add>, %55, %cst_33 [1] : vector<64x64xf32> to vector<64xf32>
    %57 = vector.shape_cast %56 : vector<64xf32> to vector<64x1xf32>
    %58 = tpu.reciprocal %57 {approx = true} : vector<64x1xf32> -> vector<64x1xf32>
    %59 = vector.broadcast %58 : vector<64x1xf32> to vector<64x64xf32>
    %60 = arith.mulf %55, %59 : vector<64x64xf32>
    %61 = arith.truncf %60 : vector<64x64xf32> to vector<64x64xbf16>
    %62 = arith.truncf %27 : vector<64x32xf32> to vector<64x32xbf16>
    %cst_34 = arith.constant dense<0.000000e+00> : vector<64x32xf32>
    %63 = tpu.matmul %61, %62, %cst_34 {dimension_numbers = #tpu.dot_dimension_numbers<[1], [0], [0], [1], [0, 0, 1, 1], [], []>} : vector<64x64xbf16>, vector<64x32xbf16>, vector<64x32xf32> -> vector<64x32xf32>
    %64 = vector.extract_strided_slice %10 {offsets = [0, 32], sizes = [64, 32], strides = [1, 1]} : vector<64x64xf32> to vector<64x32xf32>
    %65 = vector.extract_strided_slice %15 {offsets = [0, 32], sizes = [64, 32], strides = [1, 1]} : vector<64x64xf32> to vector<64x32xf32>
    %66 = vector.extract_strided_slice %20 {offsets = [0, 32], sizes = [64, 32], strides = [1, 1]} : vector<64x64xf32> to vector<64x32xf32>
    %67 = vector.extract_strided_slice %64 {offsets = [0, 0], sizes = [64, 16], strides = [1, 1]} : vector<64x32xf32> to vector<64x16xf32>
    %68 = vector.extract_strided_slice %64 {offsets = [0, 16], sizes = [64, 16], strides = [1, 1]} : vector<64x32xf32> to vector<64x16xf32>
    %69 = vector.extract_strided_slice %65 {offsets = [0, 0], sizes = [64, 16], strides = [1, 1]} : vector<64x32xf32> to vector<64x16xf32>
    %70 = vector.extract_strided_slice %65 {offsets = [0, 16], sizes = [64, 16], strides = [1, 1]} : vector<64x32xf32> to vector<64x16xf32>
    %71 = arith.mulf %67, %21 : vector<64x16xf32>
    %72 = arith.mulf %68, %22 : vector<64x16xf32>
    %73 = arith.subf %71, %72 : vector<64x16xf32>
    %74 = arith.mulf %68, %21 : vector<64x16xf32>
    %75 = arith.mulf %67, %22 : vector<64x16xf32>
    %76 = arith.addf %74, %75 : vector<64x16xf32>
    %77 = tpu.concatenate %73, %76 in 1 : vector<64x16xf32>, vector<64x16xf32> -> vector<64x32xf32>
    %78 = arith.mulf %69, %23 : vector<64x16xf32>
    %79 = arith.mulf %70, %24 : vector<64x16xf32>
    %80 = arith.subf %78, %79 : vector<64x16xf32>
    %81 = arith.mulf %70, %23 : vector<64x16xf32>
    %82 = arith.mulf %69, %24 : vector<64x16xf32>
    %83 = arith.addf %81, %82 : vector<64x16xf32>
    %84 = tpu.concatenate %80, %83 in 1 : vector<64x16xf32>, vector<64x16xf32> -> vector<64x32xf32>
    %85 = arith.truncf %77 : vector<64x32xf32> to vector<64x32xbf16>
    %86 = arith.truncf %84 : vector<64x32xf32> to vector<64x32xbf16>
    %cst_35 = arith.constant dense<0.000000e+00> : vector<64x64xf32>
    %87 = tpu.matmul %85, %86, %cst_35 {dimension_numbers = #tpu.dot_dimension_numbers<[1], [1], [0], [0], [0, 0, 1, 0], [], []>} : vector<64x32xbf16>, vector<64x32xbf16>, vector<64x64xf32> -> vector<64x64xf32>
    %cst_36 = arith.constant 0.176776692 : f32
    %88 = vector.broadcast %cst_36 : f32 to vector<64x64xf32>
    %89 = arith.mulf %87, %88 : vector<64x64xf32>
    %cst_37 = arith.constant dense<0xFF800000> : vector<64xf32>
    %90 = vector.multi_reduction <maximumf>, %89, %cst_37 [1] : vector<64x64xf32> to vector<64xf32>
    %91 = vector.shape_cast %90 : vector<64xf32> to vector<64x1xf32>
    %92 = vector.broadcast %91 : vector<64x1xf32> to vector<64x64xf32>
    %93 = arith.subf %89, %92 : vector<64x64xf32>
    %94 = math.exp %93 : vector<64x64xf32>
    %cst_38 = arith.constant dense<0.000000e+00> : vector<64xf32>
    %95 = vector.multi_reduction <add>, %94, %cst_38 [1] : vector<64x64xf32> to vector<64xf32>
    %96 = vector.shape_cast %95 : vector<64xf32> to vector<64x1xf32>
    %97 = tpu.reciprocal %96 {approx = true} : vector<64x1xf32> -> vector<64x1xf32>
    %98 = vector.broadcast %97 : vector<64x1xf32> to vector<64x64xf32>
    %99 = arith.mulf %94, %98 : vector<64x64xf32>
    %100 = arith.truncf %99 : vector<64x64xf32> to vector<64x64xbf16>
    %101 = arith.truncf %66 : vector<64x32xf32> to vector<64x32xbf16>
    %cst_39 = arith.constant dense<0.000000e+00> : vector<64x32xf32>
    %102 = tpu.matmul %100, %101, %cst_39 {dimension_numbers = #tpu.dot_dimension_numbers<[1], [0], [0], [1], [0, 0, 1, 1], [], []>} : vector<64x64xbf16>, vector<64x32xbf16>, vector<64x32xf32> -> vector<64x32xf32>
    %103 = tpu.concatenate %63, %102 in 1 : vector<64x32xf32>, vector<64x32xf32> -> vector<64x64xf32>
    %104 = arith.truncf %103 : vector<64x64xf32> to vector<64x64xbf16>
    %c0_40 = arith.constant 0 : index
    %c0_41 = arith.constant 0 : index
    %105 = vector.load %arg10[%c0_40, %c0_41] : memref<64x64xbf16, #tpu.memory_space<vmem>>, vector<64x64xbf16>
    %cst_42 = arith.constant dense<0.000000e+00> : vector<64x64xf32>
    %106 = tpu.matmul %104, %105, %cst_42 {dimension_numbers = #tpu.dot_dimension_numbers<[1], [0], [0], [1], [0, 0, 1, 1], [], []>} : vector<64x64xbf16>, vector<64x64xbf16>, vector<64x64xf32> -> vector<64x64xf32>
    %c0_43 = arith.constant 0 : index
    %c0_44 = arith.constant 0 : index
    %107 = vector.load %arg11[%c0_43, %c0_44] : memref<1x64xf32, #tpu.memory_space<vmem>>, vector<1x64xf32>
    %108 = vector.broadcast %107 : vector<1x64xf32> to vector<64x64xf32>
    %109 = arith.addf %106, %108 : vector<64x64xf32>
    %c0_45 = arith.constant 0 : index
    %c0_46 = arith.constant 0 : index
    %c0_47 = arith.constant 0 : index
    %110 = vector.load %arg16[%c0_45, %c0_46, %c0_47] : memref<1x64x64xf32, #tpu.memory_space<vmem>>, vector<1x64x64xf32>
    %111 = vector.shape_cast %110 : vector<1x64x64xf32> to vector<64x64xf32>
    %112 = vector.shape_cast %109 : vector<64x64xf32> to vector<1x64x64xf32>
    tpu.vector_store %arg16[%c0_45, %c0_46, %c0_47], %112 {strides = array<i32>} : memref<1x64x64xf32, #tpu.memory_space<vmem>>, vector<1x64x64xf32>,
    return
  }
  func.func @transform_0(%arg0: i32) -> (i32, i32, i32) {
    %c0_i32 = arith.constant 0 : i32
    %c0_i32_0 = arith.constant 0 : i32
    %c0_i32_1 = arith.constant 0 : i32
    return %arg0, %c0_i32, %c0_i32_0 : i32, i32, i32
  }
  func.func @transform_1(%arg0: i32) -> (i32, i32, i32) {
    %c0_i32 = arith.constant 0 : i32
    %c0_i32_0 = arith.constant 0 : i32
    %c0_i32_1 = arith.constant 0 : i32
    return %arg0, %c0_i32, %c0_i32_0 : i32, i32, i32
  }
  func.func @transform_2(%arg0: i32) -> (i32, i32, i32) {
    %c0_i32 = arith.constant 0 : i32
    %c0_i32_0 = arith.constant 0 : i32
    %c0_i32_1 = arith.constant 0 : i32
    return %arg0, %c0_i32, %c0_i32_0 : i32, i32, i32
  }
  func.func @transform_3(%arg0: i32) -> (i32, i32) {
    %c0_i32 = arith.constant 0 : i32
    %c0_i32_0 = arith.constant 0 : i32
    %c0_i32_1 = arith.constant 0 : i32
    return %c0_i32, %c0_i32_0 : i32, i32
  }
  func.func @transform_4(%arg0: i32) -> (i32, i32) {
    %c0_i32 = arith.constant 0 : i32
    %c0_i32_0 = arith.constant 0 : i32
    %c0_i32_1 = arith.constant 0 : i32
    return %c0_i32, %c0_i32_0 : i32, i32
  }
  func.func @transform_5(%arg0: i32) -> (i32, i32) {
    %c0_i32 = arith.constant 0 : i32
    %c0_i32_0 = arith.constant 0 : i32
    %c0_i32_1 = arith.constant 0 : i32
    return %c0_i32, %c0_i32_0 : i32, i32
  }
  func.func @transform_6(%arg0: i32) -> (i32, i32) {
    %c0_i32 = arith.constant 0 : i32
    %c0_i32_0 = arith.constant 0 : i32
    %c0_i32_1 = arith.constant 0 : i32
    return %c0_i32, %c0_i32_0 : i32, i32
  }
  func.func @transform_7(%arg0: i32) -> (i32, i32) {
    %c0_i32 = arith.constant 0 : i32
    %c0_i32_0 = arith.constant 0 : i32
    %c0_i32_1 = arith.constant 0 : i32
    return %c0_i32, %c0_i32_0 : i32, i32
  }
  func.func @transform_8(%arg0: i32) -> (i32, i32) {
    %c0_i32 = arith.constant 0 : i32
    %c0_i32_0 = arith.constant 0 : i32
    %c0_i32_1 = arith.constant 0 : i32
    return %c0_i32, %c0_i32_0 : i32, i32
  }
  func.func @transform_9(%arg0: i32) -> (i32, i32) {
    %c0_i32 = arith.constant 0 : i32
    %c0_i32_0 = arith.constant 0 : i32
    %c0_i32_1 = arith.constant 0 : i32
    return %c0_i32, %c0_i32_0 : i32, i32
  }
  func.func @transform_10(%arg0: i32) -> (i32, i32) {
    %c0_i32 = arith.constant 0 : i32
    %c0_i32_0 = arith.constant 0 : i32
    %c0_i32_1 = arith.constant 0 : i32
    return %c0_i32, %c0_i32_0 : i32, i32
  }
  func.func @transform_11(%arg0: i32) -> (i32, i32) {
    %c0_i32 = arith.constant 0 : i32
    %c0_i32_0 = arith.constant 0 : i32
    %c0_i32_1 = arith.constant 0 : i32
    return %c0_i32, %c0_i32_0 : i32, i32
  }
  func.func @transform_12(%arg0: i32) -> (i32, i32) {
    %c0_i32 = arith.constant 0 : i32
    %c0_i32_0 = arith.constant 0 : i32
    %c0_i32_1 = arith.constant 0 : i32
    return %c0_i32, %c0_i32_0 : i32, i32
  }
  func.func @transform_13(%arg0: i32) -> (i32, i32) {
    %c0_i32 = arith.constant 0 : i32
    %c0_i32_0 = arith.constant 0 : i32
    %c0_i32_1 = arith.constant 0 : i32
    return %c0_i32, %c0_i32_0 : i32, i32
  }
  func.func @transform_14(%arg0: i32) -> (i32, i32) {
    %c0_i32 = arith.constant 0 : i32
    %c0_i32_0 = arith.constant 0 : i32
    %c0_i32_1 = arith.constant 0 : i32
    return %c0_i32, %c0_i32_0 : i32, i32
  }
  func.func @transform_15(%arg0: i32) -> (i32, i32, i32) {
    %c0_i32 = arith.constant 0 : i32
    %c0_i32_0 = arith.constant 0 : i32
    %c0_i32_1 = arith.constant 0 : i32
    return %arg0, %c0_i32, %c0_i32_0 : i32, i32, i32
  }
}

</mosaic_0001>

<llo_original>
// kernel: tpu_custom_call.1
$region0: #{tpu_custom_call.1}
  #allocation0 [shape = 'u32[]', space=smem, size = 0x4, offset = 0x4, fixed_abs, tag = 'smem constant byte address 0x4 - core index']
  #allocation1 [shape = 'u32[72,128]{1,0:T(1,128)}', space=vmem, size = 0x9000, scoped, tag = 'internal scratch']
  %s0 = inlined_call_operand.vmem [shape: bf16[2,64,64], index: 0, kind: input, shape index: {}]
  %s1 = inlined_call_operand.vmem [shape: bf16[2,64,64], index: 1, kind: input, shape index: {}]
  %s2 = inlined_call_operand.vmem [shape: bf16[2,64,64], index: 2, kind: input, shape index: {}]
  %s3 = inlined_call_operand.vmem [shape: bf16[64,64], index: 3, kind: input, shape index: {}]
  %s4 = inlined_call_operand.vmem [shape: f32[1,64], index: 4, kind: input, shape index: {}]
  %s5 = inlined_call_operand.vmem [shape: bf16[64,64], index: 5, kind: input, shape index: {}]
  %s6 = inlined_call_operand.vmem [shape: f32[1,64], index: 6, kind: input, shape index: {}]
  %s7 = inlined_call_operand.hbm [shape: bf16[64,64], index: 7, kind: input, shape index: {}]
  %s8 = inlined_call_operand.vmem [shape: f32[1,64], index: 8, kind: input, shape index: {}]
  %s9 = inlined_call_operand.hbm [shape: bf16[64,64], index: 9, kind: input, shape index: {}]
  %s10 = inlined_call_operand.vmem [shape: f32[1,64], index: 10, kind: input, shape index: {}]
  %s11 = inlined_call_operand.vmem [shape: f32[64,16], index: 11, kind: input, shape index: {}]
  %s12 = inlined_call_operand.vmem [shape: f32[64,16], index: 12, kind: input, shape index: {}]
  %s13 = inlined_call_operand.vmem [shape: f32[64,16], index: 13, kind: input, shape index: {}]
  %s14 = inlined_call_operand.vmem [shape: f32[64,16], index: 14, kind: input, shape index: {}]
  %s15 = inlined_call_operand.hbm [shape: f32[2,64,64], index: 15, kind: output, shape index: {}]
  %s16 = sld [smem:[#allocation0]]
  $region101: #{tpu_custom_call.1} parent=0
    _
  %s18 = ssub.s32 1, %s16
  %s19 = scalar_select 0, %s18, %s16
  $region1: #{tpu_custom_call.1} parent=0
    #allocation2 [shape = 'u8[16384]{0}', space=vmem, size = 0x4000, scoped, tag = 'input window, operand 7, single buffered']
    #allocation3 [shape = 's32[2]{0}', space=sflag, size = 0x8, scoped, tag = 'scoped memory for tpu_custom_call.1']
    #allocation4 [shape = 's32[2]{0}', space=sflag, size = 0x8, scoped, tag = 'scoped memory for tpu_custom_call.1']
    #allocation5 [shape = 'u8[16384]{0}', space=vmem, size = 0x4000, scoped, tag = 'input window, operand 9, single buffered']
    #allocation6 [shape = 's32[1]{0}', space=sflag, size = 0x4, scoped, tag = 'scoped memory for tpu_custom_call.1']
    #allocation7 [shape = 'u8[65536]{0}', space=vmem, size = 0x10000, scoped, tag = 'output window, operand 0']
    %20 = vsyncpa [#allocation3], 0
    %21 = vsyncpa [#allocation6], 0
    %22 = vsyncpa [#allocation4], 0
    %s23 = scalar_lea.sflag [#allocation4], 1
    %24 = vsyncpa %s23, 0
    loop: start=0, step=1, limit=4
    $region2: #{tpu_custom_call.1} parent=1 // loop_pre_header
      _
    $region3: #{tpu_custom_call.1} parent=1 // loop_header
      %s26 = sphi 0, %s30
      %p27 = scmp.ge.s32.totalorder %s26, 4
      %s36 = sphi 0, %s38
      %s39 = sphi 0, %s36
      %s40 = sphi 0, %s39
      %s56 = sphi 0, %s40
      %s62 = sphi 0, %s64
      %s65 = sphi 0, %s62
      %s66 = sphi 0, %s65
      %s82 = sphi 0, %s66
      %s88 = sphi 0, %s90
      %s91 = sphi 0, %s88
      %s92 = sphi 0, %s91
      %s108 = sphi 0, %s92
      %s112 = sphi 0, %s112
      %s114 = sphi 0, %s112
      %s115 = sphi 0, %s114
      %s129 = sphi 0, %s115
      %s133 = sphi 0, %s133
      %s135 = sphi 0, %s133
      %s136 = sphi 0, %s135
      %s150 = sphi 0, %s136
      %s154 = sphi 0, %s154
      %s156 = sphi 0, %s154
      %s157 = sphi 0, %s156
      %s171 = sphi 0, %s157
      %s175 = sphi 0, %s175
      %s177 = sphi 0, %s175
      %s178 = sphi 0, %s177
      %s192 = sphi 0, %s178
      %s196 = sphi 0, %s196
      %s198 = sphi 0, %s196
      %s199 = sphi 0, %s198
      %s213 = sphi 0, %s199
      %s217 = sphi 0, %s217
      %s219 = sphi 0, %s217
      %s220 = sphi 0, %s219
      %s234 = sphi 0, %s220
      %s238 = sphi 0, %s238
      %s240 = sphi 0, %s238
      %s241 = sphi 0, %s240
      %s255 = sphi 0, %s241
      %s259 = sphi 0, %s259
      %s261 = sphi 0, %s259
      %s262 = sphi 0, %s261
      %s276 = sphi 0, %s262
      %s280 = sphi 0, %s280
      %s282 = sphi 0, %s280
      %s283 = sphi 0, %s282
      %s297 = sphi 0, %s283
      %s301 = sphi 0, %s301
      %s303 = sphi 0, %s301
      %s304 = sphi 0, %s303
      %s318 = sphi 0, %s304
      %s322 = sphi 0, %s322
      %s324 = sphi 0, %s322
      %s325 = sphi 0, %s324
      %s339 = sphi 0, %s325
      %s343 = sphi 0, %s343
      %s345 = sphi 0, %s343
      %s346 = sphi 0, %s345
      %s360 = sphi 0, %s346
      %s366 = sphi 0, %s368
      %s369 = sphi 0, %s366
      %s370 = sphi 0, %s369
      %s386 = sphi 0, %s370
    $region4: #{tpu_custom_call.1} parent=1 // loop_header_branch
      %29 = sbr.rel (%p27) target = $region8
    $region5: #{tpu_custom_call.1} parent=1 // loop_body
      %s31 = ssub.s32 %s26, 1
      %s32 = ssub.s32 %s26, 2
      %s33 = sadd.s32 %s26, 1
      %s34 = ssub.s32 %s26, %s33
      %p35 = scmp.eq.s32.totalorder %s34, 0
      %s37 = sadd.s32 %s36, 1
      %s38 = scalar_select %p35, %s36, %s37
      %p41 = pneg %p35
      %p42 = scmp.eq.s32.totalorder %s26, 1
      %p43 = por %p41, %p42
      %p44 = scmp.ne.s32.totalorder %s36, %s39
      %p45 = scmp.eq.s32.totalorder %s26, 0
      %p46 = por %p44, %p45
      %p47 = scmp.ne.s32.totalorder %s36, %s39
      %p48 = scmp.eq.s32.totalorder %s31, 1
      %p49 = por %p47, %p48
      %p50 = scmp.ne.s32.totalorder %s39, %s40
      %p51 = scmp.eq.s32.totalorder %s31, 0
      %p52 = por %p50, %p51
      %p53 = scmp.ne.s32.totalorder %s39, %s40
      %p54 = scmp.eq.s32.totalorder %s32, 1
      %p55 = por %p53, %p54
      %p57 = scmp.ne.s32.totalorder %s40, %s56
      %p58 = scmp.eq.s32.totalorder %s32, 0
      %p59 = por %p57, %p58
      %s60 = ssub.s32 %s26, %s33
      %p61 = scmp.eq.s32.totalorder %s60, 0
      %s63 = sadd.s32 %s62, 1
      %s64 = scalar_select %p61, %s62, %s63
      %p67 = pneg %p61
      %p68 = scmp.eq.s32.totalorder %s26, 1
      %p69 = por %p67, %p68
      %p70 = scmp.ne.s32.totalorder %s62, %s65
      %p71 = scmp.eq.s32.totalorder %s26, 0
      %p72 = por %p70, %p71
      %p73 = scmp.ne.s32.totalorder %s62, %s65
      %p74 = scmp.eq.s32.totalorder %s31, 1
      %p75 = por %p73, %p74
      %p76 = scmp.ne.s32.totalorder %s65, %s66
      %p77 = scmp.eq.s32.totalorder %s31, 0
      %p78 = por %p76, %p77
      %p79 = scmp.ne.s32.totalorder %s65, %s66
      %p80 = scmp.eq.s32.totalorder %s32, 1
      %p81 = por %p79, %p80
      %p83 = scmp.ne.s32.totalorder %s66, %s82
      %p84 = scmp.eq.s32.totalorder %s32, 0
      %p85 = por %p83, %p84
      %s86 = ssub.s32 %s26, %s33
      %p87 = scmp.eq.s32.totalorder %s86, 0
      %s89 = sadd.s32 %s88, 1
      %s90 = scalar_select %p87, %s88, %s89
      %p93 = pneg %p87
      %p94 = scmp.eq.s32.totalorder %s26, 1
      %p95 = por %p93, %p94
      %p96 = scmp.ne.s32.totalorder %s88, %s91
      %p97 = scmp.eq.s32.totalorder %s26, 0
      %p98 = por %p96, %p97
      %p99 = scmp.ne.s32.totalorder %s88, %s91
      %p100 = scmp.eq.s32.totalorder %s31, 1
      %p101 = por %p99, %p100
      %p102 = scmp.ne.s32.totalorder %s91, %s92
      %p103 = scmp.eq.s32.totalorder %s31, 0
      %p104 = por %p102, %p103
      %p105 = scmp.ne.s32.totalorder %s91, %s92
      %p106 = scmp.eq.s32.totalorder %s32, 1
      %p107 = por %p105, %p106
      %p109 = scmp.ne.s32.totalorder %s92, %s108
      %p110 = scmp.eq.s32.totalorder %s32, 0
      %p111 = por %p109, %p110
      %s113 = sadd.s32 %s112, 1
      %p116 = scmp.eq.s32.totalorder %s26, 1
      %p117 = scmp.ne.s32.totalorder %s112, %s114
      %p118 = scmp.eq.s32.totalorder %s26, 0
      %p119 = por %p117, %p118
      %p120 = scmp.ne.s32.totalorder %s112, %s114
      %p121 = scmp.eq.s32.totalorder %s31, 1
      %p122 = por %p120, %p121
      %p123 = scmp.ne.s32.totalorder %s114, %s115
      %p124 = scmp.eq.s32.totalorder %s31, 0
      %p125 = por %p123, %p124
      %p126 = scmp.ne.s32.totalorder %s114, %s115
      %p127 = scmp.eq.s32.totalorder %s32, 1
      %p128 = por %p126, %p127
      %p130 = scmp.ne.s32.totalorder %s115, %s129
      %p131 = scmp.eq.s32.totalorder %s32, 0
      %p132 = por %p130, %p131
      %s134 = sadd.s32 %s133, 1
      %p137 = scmp.eq.s32.totalorder %s26, 1
      %p138 = scmp.ne.s32.totalorder %s133, %s135
      %p139 = scmp.eq.s32.totalorder %s26, 0
      %p140 = por %p138, %p139
      %p141 = scmp.ne.s32.totalorder %s133, %s135
      %p142 = scmp.eq.s32.totalorder %s31, 1
      %p143 = por %p141, %p142
      %p144 = scmp.ne.s32.totalorder %s135, %s136
      %p145 = scmp.eq.s32.totalorder %s31, 0
      %p146 = por %p144, %p145
      %p147 = scmp.ne.s32.totalorder %s135, %s136
      %p148 = scmp.eq.s32.totalorder %s32, 1
      %p149 = por %p147, %p148
      %p151 = scmp.ne.s32.totalorder %s136, %s150
      %p152 = scmp.eq.s32.totalorder %s32, 0
      %p153 = por %p151, %p152
      %s155 = sadd.s32 %s154, 1
      %p158 = scmp.eq.s32.totalorder %s26, 1
      %p159 = scmp.ne.s32.totalorder %s154, %s156
      %p160 = scmp.eq.s32.totalorder %s26, 0
      %p161 = por %p159, %p160
      %p162 = scmp.ne.s32.totalorder %s154, %s156
      %p163 = scmp.eq.s32.totalorder %s31, 1
      %p164 = por %p162, %p163
      %p165 = scmp.ne.s32.totalorder %s156, %s157
      %p166 = scmp.eq.s32.totalorder %s31, 0
      %p167 = por %p165, %p166
      %p168 = scmp.ne.s32.totalorder %s156, %s157
      %p169 = scmp.eq.s32.totalorder %s32, 1
      %p170 = por %p168, %p169
      %p172 = scmp.ne.s32.totalorder %s157, %s171
      %p173 = scmp.eq.s32.totalorder %s32, 0
      %p174 = por %p172, %p173
      %s176 = sadd.s32 %s175, 1
      %p179 = scmp.eq.s32.totalorder %s26, 1
      %p180 = scmp.ne.s32.totalorder %s175, %s177
      %p181 = scmp.eq.s32.totalorder %s26, 0
      %p182 = por %p180, %p181
      %p183 = scmp.ne.s32.totalorder %s175, %s177
      %p184 = scmp.eq.s32.totalorder %s31, 1
      %p185 = por %p183, %p184
      %p186 = scmp.ne.s32.totalorder %s177, %s178
      %p187 = scmp.eq.s32.totalorder %s31, 0
      %p188 = por %p186, %p187
      %p189 = scmp.ne.s32.totalorder %s177, %s178
      %p190 = scmp.eq.s32.totalorder %s32, 1
      %p191 = por %p189, %p190
      %p193 = scmp.ne.s32.totalorder %s178, %s192
      %p194 = scmp.eq.s32.totalorder %s32, 0
      %p195 = por %p193, %p194
      %s197 = sadd.s32 %s196, 1
      %p200 = scmp.eq.s32.totalorder %s26, 1
      %p201 = scmp.ne.s32.totalorder %s196, %s198
      %p202 = scmp.eq.s32.totalorder %s26, 0
      %p203 = por %p201, %p202
      %p204 = scmp.ne.s32.totalorder %s196, %s198
      %p205 = scmp.eq.s32.totalorder %s31, 1
      %p206 = por %p204, %p205
      %p207 = scmp.ne.s32.totalorder %s198, %s199
      %p208 = scmp.eq.s32.totalorder %s31, 0
      %p209 = por %p207, %p208
      %p210 = scmp.ne.s32.totalorder %s198, %s199
      %p211 = scmp.eq.s32.totalorder %s32, 1
      %p212 = por %p210, %p211
      %p214 = scmp.ne.s32.totalorder %s199, %s213
      %p215 = scmp.eq.s32.totalorder %s32, 0
      %p216 = por %p214, %p215
      %s218 = sadd.s32 %s217, 1
      %p221 = scmp.eq.s32.totalorder %s26, 1
      %p222 = scmp.ne.s32.totalorder %s217, %s219
      %p223 = scmp.eq.s32.totalorder %s26, 0
      %p224 = por %p222, %p223
      %p225 = scmp.ne.s32.totalorder %s217, %s219
      %p226 = scmp.eq.s32.totalorder %s31, 1
      %p227 = por %p225, %p226
      %p228 = scmp.ne.s32.totalorder %s219, %s220
      %p229 = scmp.eq.s32.totalorder %s31, 0
      %p230 = por %p228, %p229
      %p231 = scmp.ne.s32.totalorder %s219, %s220
      %p232 = scmp.eq.s32.totalorder %s32, 1
      %p233 = por %p231, %p232
      %p235 = scmp.ne.s32.totalorder %s220, %s234
      %p236 = scmp.eq.s32.totalorder %s32, 0
      %p237 = por %p235, %p236
      %s239 = sadd.s32 %s238, 1
      %p242 = scmp.eq.s32.totalorder %s26, 1
      %p243 = scmp.ne.s32.totalorder %s238, %s240
      %p244 = scmp.eq.s32.totalorder %s26, 0
      %p245 = por %p243, %p244
      %p246 = scmp.ne.s32.totalorder %s238, %s240
      %p247 = scmp.eq.s32.totalorder %s31, 1
      %p248 = por %p246, %p247
      %p249 = scmp.ne.s32.totalorder %s240, %s241
      %p250 = scmp.eq.s32.totalorder %s31, 0
      %p251 = por %p249, %p250
      %p252 = scmp.ne.s32.totalorder %s240, %s241
      %p253 = scmp.eq.s32.totalorder %s32, 1
      %p254 = por %p252, %p253
      %p256 = scmp.ne.s32.totalorder %s241, %s255
      %p257 = scmp.eq.s32.totalorder %s32, 0
      %p258 = por %p256, %p257
      %s260 = sadd.s32 %s259, 1
      %p263 = scmp.eq.s32.totalorder %s26, 1
      %p264 = scmp.ne.s32.totalorder %s259, %s261
      %p265 = scmp.eq.s32.totalorder %s26, 0
      %p266 = por %p264, %p265
      %p267 = scmp.ne.s32.totalorder %s259, %s261
      %p268 = scmp.eq.s32.totalorder %s31, 1
      %p269 = por %p267, %p268
      %p270 = scmp.ne.s32.totalorder %s261, %s262
      %p271 = scmp.eq.s32.totalorder %s31, 0
      %p272 = por %p270, %p271
      %p273 = scmp.ne.s32.totalorder %s261, %s262
      %p274 = scmp.eq.s32.totalorder %s32, 1
      %p275 = por %p273, %p274
      %p277 = scmp.ne.s32.totalorder %s262, %s276
      %p278 = scmp.eq.s32.totalorder %s32, 0
      %p279 = por %p277, %p278
      %s281 = sadd.s32 %s280, 1
      %p284 = scmp.eq.s32.totalorder %s26, 1
      %p285 = scmp.ne.s32.totalorder %s280, %s282
      %p286 = scmp.eq.s32.totalorder %s26, 0
      %p287 = por %p285, %p286
      %p288 = scmp.ne.s32.totalorder %s280, %s282
      %p289 = scmp.eq.s32.totalorder %s31, 1
      %p290 = por %p288, %p289
      %p291 = scmp.ne.s32.totalorder %s282, %s283
      %p292 = scmp.eq.s32.totalorder %s31, 0
      %p293 = por %p291, %p292
      %p294 = scmp.ne.s32.totalorder %s282, %s283
      %p295 = scmp.eq.s32.totalorder %s32, 1
      %p296 = por %p294, %p295
      %p298 = scmp.ne.s32.totalorder %s283, %s297
      %p299 = scmp.eq.s32.totalorder %s32, 0
      %p300 = por %p298, %p299
      %s302 = sadd.s32 %s301, 1
      %p305 = scmp.eq.s32.totalorder %s26, 1
      %p306 = scmp.ne.s32.totalorder %s301, %s303
      %p307 = scmp.eq.s32.totalorder %s26, 0
      %p308 = por %p306, %p307
      %p309 = scmp.ne.s32.totalorder %s301, %s303
      %p310 = scmp.eq.s32.totalorder %s31, 1
      %p311 = por %p309, %p310
      %p312 = scmp.ne.s32.totalorder %s303, %s304
      %p313 = scmp.eq.s32.totalorder %s31, 0
      %p314 = por %p312, %p313
      %p315 = scmp.ne.s32.totalorder %s303, %s304
      %p316 = scmp.eq.s32.totalorder %s32, 1
      %p317 = por %p315, %p316
      %p319 = scmp.ne.s32.totalorder %s304, %s318
      %p320 = scmp.eq.s32.totalorder %s32, 0
      %p321 = por %p319, %p320
      %s323 = sadd.s32 %s322, 1
      %p326 = scmp.eq.s32.totalorder %s26, 1
      %p327 = scmp.ne.s32.totalorder %s322, %s324
      %p328 = scmp.eq.s32.totalorder %s26, 0
      %p329 = por %p327, %p328
      %p330 = scmp.ne.s32.totalorder %s322, %s324
      %p331 = scmp.eq.s32.totalorder %s31, 1
      %p332 = por %p330, %p331
      %p333 = scmp.ne.s32.totalorder %s324, %s325
      %p334 = scmp.eq.s32.totalorder %s31, 0
      %p335 = por %p333, %p334
      %p336 = scmp.ne.s32.totalorder %s324, %s325
      %p337 = scmp.eq.s32.totalorder %s32, 1
      %p338 = por %p336, %p337
      %p340 = scmp.ne.s32.totalorder %s325, %s339
      %p341 = scmp.eq.s32.totalorder %s32, 0
      %p342 = por %p340, %p341
      %s344 = sadd.s32 %s343, 1
      %p347 = scmp.eq.s32.totalorder %s26, 1
      %p348 = scmp.ne.s32.totalorder %s343, %s345
      %p349 = scmp.eq.s32.totalorder %s26, 0
      %p350 = por %p348, %p349
      %p351 = scmp.ne.s32.totalorder %s343, %s345
      %p352 = scmp.eq.s32.totalorder %s31, 1
      %p353 = por %p351, %p352
      %p354 = scmp.ne.s32.totalorder %s345, %s346
      %p355 = scmp.eq.s32.totalorder %s31, 0
      %p356 = por %p354, %p355
      %p357 = scmp.ne.s32.totalorder %s345, %s346
      %p358 = scmp.eq.s32.totalorder %s32, 1
      %p359 = por %p357, %p358
      %p361 = scmp.ne.s32.totalorder %s346, %s360
      %p362 = scmp.eq.s32.totalorder %s32, 0
      %p363 = por %p361, %p362
      %s364 = ssub.s32 %s26, %s33
      %p365 = scmp.eq.s32.totalorder %s364, 0
      %s367 = sadd.s32 %s366, 1
      %s368 = scalar_select %p365, %s366, %s367
      %p371 = pneg %p365
      %p372 = scmp.eq.s32.totalorder %s26, 1
      %p373 = por %p371, %p372
      %p374 = scmp.ne.s32.totalorder %s366, %s369
      %p375 = scmp.eq.s32.totalorder %s26, 0
      %p376 = por %p374, %p375
      %p377 = scmp.ne.s32.totalorder %s366, %s369
      %p378 = scmp.eq.s32.totalorder %s31, 1
      %p379 = por %p377, %p378
      %p380 = scmp.ne.s32.totalorder %s369, %s370
      %p381 = scmp.eq.s32.totalorder %s31, 0
      %p382 = por %p380, %p381
      %p383 = scmp.ne.s32.totalorder %s369, %s370
      %p384 = scmp.eq.s32.totalorder %s32, 1
      %p385 = por %p383, %p384
      %p387 = scmp.ne.s32.totalorder %s370, %s386
      %p388 = scmp.eq.s32.totalorder %s32, 0
      %p389 = por %p387, %p388
      %p390 = scmp.le.s32.totalorder 1, %s26
      %p391 = scmp.lt.s32.totalorder %s26, 3
      %p392 = pnand %p390, %p391
      %p393 = pneg %p392
      // Predicated region
      $region9: #{tpu_custom_call.1} parent=5 // pred_check
        _
      $region10: #{tpu_custom_call.1} parent=5 // pred_check_branch
        %395 = sbr.rel (%p392) target = $region12
      $region11: #{tpu_custom_call.1} parent=5 // pred_region
        %s396 = ssub.s32 %s26, 1
        // Predicated region
        $region13: #{tpu_custom_call.1} parent=11 // pred_check
          %p397 = pneg %p125
        $region14: #{tpu_custom_call.1} parent=11 // pred_check_branch
          %399 = sbr.rel (%p397) target = $region16
        $region15: #{tpu_custom_call.1} parent=11 // pred_region
          _
        $region16: #{tpu_custom_call.1} parent=11 // pred_fallthru
          _
        // Predicated region
        $region17: #{tpu_custom_call.1} parent=11 // pred_check
          %p400 = pneg %p146
        $region18: #{tpu_custom_call.1} parent=11 // pred_check_branch
          %402 = sbr.rel (%p400) target = $region20
        $region19: #{tpu_custom_call.1} parent=11 // pred_region
          _
        $region20: #{tpu_custom_call.1} parent=11 // pred_fallthru
          _
        // Predicated region
        $region21: #{tpu_custom_call.1} parent=11 // pred_check
          %p403 = pneg %p167
        $region22: #{tpu_custom_call.1} parent=11 // pred_check_branch
          %405 = sbr.rel (%p403) target = $region24
        $region23: #{tpu_custom_call.1} parent=11 // pred_region
          _
        $region24: #{tpu_custom_call.1} parent=11 // pred_fallthru
          _
        // Predicated region
        $region25: #{tpu_custom_call.1} parent=11 // pred_check
          %p406 = pneg %p188
        $region26: #{tpu_custom_call.1} parent=11 // pred_check_branch
          %408 = sbr.rel (%p406) target = $region28
        $region27: #{tpu_custom_call.1} parent=11 // pred_region
          _
        $region28: #{tpu_custom_call.1} parent=11 // pred_fallthru
          _
        // Predicated region
        $region29: #{tpu_custom_call.1} parent=11 // pred_check
          %p409 = pneg %p209
        $region30: #{tpu_custom_call.1} parent=11 // pred_check_branch
          %411 = sbr.rel (%p409) target = $region32
        $region31: #{tpu_custom_call.1} parent=11 // pred_region
          %413 = vsyncadd [#allocation3], 0
          %s414 = sshll.u32 %s7, 4
          %s415 = int_to_ptr.hbm [resolvable:$true] %s414
          %s416 = sshll.u32 [#allocation2], 4
          %s417 = int_to_ptr.vmem [resolvable:$true] %s416
          %422 = dma.hbm_to_vmem [thread:$0]  %s415, 512, %s417, [#allocation3], 64, 64, 4
        $region32: #{tpu_custom_call.1} parent=11 // pred_fallthru
          _
        // Predicated region
        $region33: #{tpu_custom_call.1} parent=11 // pred_check
          %p423 = pneg %p230
        $region34: #{tpu_custom_call.1} parent=11 // pred_check_branch
          %425 = sbr.rel (%p423) target = $region36
        $region35: #{tpu_custom_call.1} parent=11 // pred_region
          _
        $region36: #{tpu_custom_call.1} parent=11 // pred_fallthru
          _
        // Predicated region
        $region37: #{tpu_custom_call.1} parent=11 // pred_check
          %p426 = pneg %p251
        $region38: #{tpu_custom_call.1} parent=11 // pred_check_branch
          %428 = sbr.rel (%p426) target = $region40
        $region39: #{tpu_custom_call.1} parent=11 // pred_region
          %430 = vsyncadd [#allocation6], 0
          %s431 = sshll.u32 %s9, 4
          %s432 = int_to_ptr.hbm [resolvable:$true] %s431
          %s433 = sshll.u32 [#allocation5], 4
          %s434 = int_to_ptr.vmem [resolvable:$true] %s433
          %439 = dma.hbm_to_vmem [thread:$0]  %s432, 512, %s434, [#allocation6], 64, 64, 4
        $region40: #{tpu_custom_call.1} parent=11 // pred_fallthru
          _
        // Predicated region
        $region41: #{tpu_custom_call.1} parent=11 // pred_check
          %p440 = pneg %p272
        $region42: #{tpu_custom_call.1} parent=11 // pred_check_branch
          %442 = sbr.rel (%p440) target = $region44
        $region43: #{tpu_custom_call.1} parent=11 // pred_region
          _
        $region44: #{tpu_custom_call.1} parent=11 // pred_fallthru
          _
        // Predicated region
        $region45: #{tpu_custom_call.1} parent=11 // pred_check
          %p443 = pneg %p293
        $region46: #{tpu_custom_call.1} parent=11 // pred_check_branch
          %445 = sbr.rel (%p443) target = $region48
        $region47: #{tpu_custom_call.1} parent=11 // pred_region
          _
        $region48: #{tpu_custom_call.1} parent=11 // pred_fallthru
          _
        // Predicated region
        $region49: #{tpu_custom_call.1} parent=11 // pred_check
          %p446 = pneg %p314
        $region50: #{tpu_custom_call.1} parent=11 // pred_check_branch
          %448 = sbr.rel (%p446) target = $region52
        $region51: #{tpu_custom_call.1} parent=11 // pred_region
          _
        $region52: #{tpu_custom_call.1} parent=11 // pred_fallthru
          _
        // Predicated region
        $region53: #{tpu_custom_call.1} parent=11 // pred_check
          %p449 = pneg %p335
        $region54: #{tpu_custom_call.1} parent=11 // pred_check_branch
          %451 = sbr.rel (%p449) target = $region56
        $region55: #{tpu_custom_call.1} parent=11 // pred_region
          _
        $region56: #{tpu_custom_call.1} parent=11 // pred_fallthru
          _
        // Predicated region
        $region57: #{tpu_custom_call.1} parent=11 // pred_check
          %p452 = pneg %p356
        $region58: #{tpu_custom_call.1} parent=11 // pred_check_branch
          %454 = sbr.rel (%p452) target = $region60
        $region59: #{tpu_custom_call.1} parent=11 // pred_region
          _
        $region60: #{tpu_custom_call.1} parent=11 // pred_fallthru
          _
      $region12: #{tpu_custom_call.1} parent=5 // pred_fallthru
        _
      %p455 = scmp.lt.s32.totalorder %s26, 2
      // Predicated region
      $region61: #{tpu_custom_call.1} parent=5 // pred_check
        %p456 = pneg %p455
      $region62: #{tpu_custom_call.1} parent=5 // pred_check_branch
        %458 = sbr.rel (%p456) target = $region64
      $region63: #{tpu_custom_call.1} parent=5 // pred_region
        // Predicated region
        $region65: #{tpu_custom_call.1} parent=63 // pred_check
          %p459 = pneg %p46
        $region66: #{tpu_custom_call.1} parent=63 // pred_check_branch
          %461 = sbr.rel (%p459) target = $region68
        $region67: #{tpu_custom_call.1} parent=63 // pred_region
          %p462 = scmp.lt.s32.totalorder %s26, 1
          %s463 = scalar_select %p462, %s26, 1
          %s464 = smul.addr %s463, 8
          %s465 = smul.addr %s464, 4
          %s466 = scalar_lea.vmem %s0, %s465
        $region68: #{tpu_custom_call.1} parent=63 // pred_fallthru
          _
        // Predicated region
        $region69: #{tpu_custom_call.1} parent=63 // pred_check
          %p467 = pneg %p72
        $region70: #{tpu_custom_call.1} parent=63 // pred_check_branch
          %469 = sbr.rel (%p467) target = $region72
        $region71: #{tpu_custom_call.1} parent=63 // pred_region
          %p470 = scmp.lt.s32.totalorder %s26, 1
          %s471 = scalar_select %p470, %s26, 1
          %s472 = smul.addr %s471, 8
          %s473 = smul.addr %s472, 4
          %s474 = scalar_lea.vmem %s1, %s473
        $region72: #{tpu_custom_call.1} parent=63 // pred_fallthru
          _
        // Predicated region
        $region73: #{tpu_custom_call.1} parent=63 // pred_check
          %p475 = pneg %p98
        $region74: #{tpu_custom_call.1} parent=63 // pred_check_branch
          %477 = sbr.rel (%p475) target = $region76
        $region75: #{tpu_custom_call.1} parent=63 // pred_region
          %p478 = scmp.lt.s32.totalorder %s26, 1
          %s479 = scalar_select %p478, %s26, 1
          %s480 = smul.addr %s479, 8
          %s481 = smul.addr %s480, 4
          %s482 = scalar_lea.vmem %s2, %s481
        $region76: #{tpu_custom_call.1} parent=63 // pred_fallthru
          _
      $region64: #{tpu_custom_call.1} parent=5 // pred_fallthru
        _
      %p483 = scmp.le.s32.totalorder 1, %s26
      %p484 = scmp.lt.s32.totalorder %s26, 3
      %p485 = pnand %p483, %p484
      %p486 = pneg %p485
      // Predicated region
      $region77: #{tpu_custom_call.1} parent=5 // pred_check
        _
      $region78: #{tpu_custom_call.1} parent=5 // pred_check_branch
        %488 = sbr.rel (%p485) target = $region80
      $region79: #{tpu_custom_call.1} parent=5 // pred_region
        %s489 = ssub.s32 %s26, 1
        // Predicated region
        $region81: #{tpu_custom_call.1} parent=79 // pred_check
          %p490 = pneg %p209
        $region82: #{tpu_custom_call.1} parent=79 // pred_check_branch
          %492 = sbr.rel (%p490) target = $region84
        $region83: #{tpu_custom_call.1} parent=79 // pred_region
          %494 = dma.done [#allocation3], 512
        $region84: #{tpu_custom_call.1} parent=79 // pred_fallthru
          _
        // Predicated region
        $region85: #{tpu_custom_call.1} parent=79 // pred_check
          %p495 = pneg %p251
        $region86: #{tpu_custom_call.1} parent=79 // pred_check_branch
          %497 = sbr.rel (%p495) target = $region88
        $region87: #{tpu_custom_call.1} parent=79 // pred_region
          %499 = dma.done [#allocation6], 512
        $region88: #{tpu_custom_call.1} parent=79 // pred_fallthru
          _
        %p500 = scmp.lt.s32.totalorder %s31, 1
        %s501 = scalar_select %p500, %s31, 1
        %s502 = smul.addr %s501, 8
        %s503 = smul.addr %s502, 4
        %s504 = scalar_lea.vmem %s0, %s503
        %p505 = pneg %p52
        %p506 = pneg %p49
        %p507 = scmp.lt.s32.totalorder %s31, 1
        %s508 = scalar_select %p507, %s31, 1
        %s509 = smul.addr %s508, 8
        %s510 = smul.addr %s509, 4
        %s511 = scalar_lea.vmem %s1, %s510
        %p512 = pneg %p78
        %p513 = pneg %p75
        %p514 = scmp.lt.s32.totalorder %s31, 1
        %s515 = scalar_select %p514, %s31, 1
        %s516 = smul.addr %s515, 8
        %s517 = smul.addr %s516, 4
        %s518 = scalar_lea.vmem %s2, %s517
        %p519 = pneg %p104
        %p520 = pneg %p101
        %p521 = pneg %p125
        %p522 = pneg %p122
        %p523 = pneg %p146
        %p524 = pneg %p143
        %p525 = pneg %p167
        %p526 = pneg %p164
        %p527 = pneg %p188
        %p528 = pneg %p185
        %p529 = pneg %p209
        %p530 = pneg %p206
        %p531 = pneg %p230
        %p532 = pneg %p227
        %p533 = pneg %p251
        %p534 = pneg %p248
        %p535 = pneg %p272
        %p536 = pneg %p269
        %p537 = pneg %p293
        %p538 = pneg %p290
        %p539 = pneg %p314
        %p540 = pneg %p311
        %p541 = pneg %p335
        %p542 = pneg %p332
        %p543 = pneg %p356
        %p544 = pneg %p353
        %p545 = pneg %p382
        %p546 = pneg %p379
        %s547 = sand.u32 %s369, 1
        %s548 = scalar_lea.sflag [#allocation4], %s547
        %s549 = sand.u32 %s369, 1
        %s550 = smul.addr %s549, 64
        %s551 = scalar_lea.vmem [#allocation7], %s550
        %p552 = scmp.lt.s32.totalorder %s31, 1
        %s553 = scalar_select %p552, %s31, 1
        %s554 = smul.addr %s553, 8
        %s555 = smul.addr %s554, 4
        %s556 = scalar_lea.vmem %s0, %s555
        %p557 = scmp.lt.s32.totalorder %s31, 1
        %s558 = scalar_select %p557, %s31, 1
        %s559 = smul.addr %s558, 8
        %s560 = smul.addr %s559, 4
        %s561 = scalar_lea.vmem %s1, %s560
        %p562 = scmp.lt.s32.totalorder %s31, 1
        %s563 = scalar_select %p562, %s31, 1
        %s564 = smul.addr %s563, 8
        %s565 = smul.addr %s564, 4
        %s566 = scalar_lea.vmem %s2, %s565
        %v568 = vld [vmem:[%s556] sm:$0xf]
        %v569 = vld [vmem:[%s556 + $0x4] sm:$0xf]
        %v570 = vld [vmem:[%s556 + $0x8] sm:$0xf]
        %v571 = vld [vmem:[%s556 + $0xc] sm:$0xf]
        %v572 = vld [vmem:[%s556 + $0x10] sm:$0xf]
        %v573 = vld [vmem:[%s556 + $0x14] sm:$0xf]
        %v574 = vld [vmem:[%s556 + $0x18] sm:$0xf]
        %v575 = vld [vmem:[%s556 + $0x1c] sm:$0xf]
        %v576 = vld [vmem:[%s561] sm:$0xf]
        %v577 = vld [vmem:[%s561 + $0x4] sm:$0xf]
        %v578 = vld [vmem:[%s561 + $0x8] sm:$0xf]
        %v579 = vld [vmem:[%s561 + $0xc] sm:$0xf]
        %v580 = vld [vmem:[%s561 + $0x10] sm:$0xf]
        %v581 = vld [vmem:[%s561 + $0x14] sm:$0xf]
        %v582 = vld [vmem:[%s561 + $0x18] sm:$0xf]
        %v583 = vld [vmem:[%s561 + $0x1c] sm:$0xf]
        %v584 = vld [vmem:[%s566] sm:$0xf]
        %v585 = vld [vmem:[%s566 + $0x4] sm:$0xf]
        %v586 = vld [vmem:[%s566 + $0x8] sm:$0xf]
        %v587 = vld [vmem:[%s566 + $0xc] sm:$0xf]
        %v588 = vld [vmem:[%s566 + $0x10] sm:$0xf]
        %v589 = vld [vmem:[%s566 + $0x14] sm:$0xf]
        %v590 = vld [vmem:[%s566 + $0x18] sm:$0xf]
        %v591 = vld [vmem:[%s566 + $0x1c] sm:$0xf]
        %v592 = vld [vmem:[%s3] sm:$0xf]
        %v593 = vld [vmem:[%s3 + $0x4] sm:$0xf]
        %v594 = vld [vmem:[%s3 + $0x8] sm:$0xf]
        %v595 = vld [vmem:[%s3 + $0xc] sm:$0xf]
        %v596 = vld [vmem:[%s3 + $0x10] sm:$0xf]
        %v597 = vld [vmem:[%s3 + $0x14] sm:$0xf]
        %v598 = vld [vmem:[%s3 + $0x18] sm:$0xf]
        %v599 = vld [vmem:[%s3 + $0x1c] sm:$0xf]
        %v600 = vld [vmem:[%s4] sm:$0x1]
        %v602 = vperm.slane %v600, 0
        %v612 = vunpack.c.l.b16 %v568
        %v613 = vunpack.c.l.b16 %v569
        %v614 = vunpack.c.l.b16 %v570
        %v615 = vunpack.c.l.b16 %v571
        %v616 = vunpack.c.l.b16 %v572
        %v617 = vunpack.c.l.b16 %v573
        %v618 = vunpack.c.l.b16 %v574
        %v619 = vunpack.c.l.b16 %v575
        %v620 = vpack.c.b16 %v613, %v612
        %v621 = vpack.c.b16 %v615, %v614
        %v622 = vpack.c.b16 %v617, %v616
        %v623 = vpack.c.b16 %v619, %v618
        %v632 = vunpack.c.l.b16 %v592
        %v633 = vunpack.c.l.b16 %v593
        %v634 = vunpack.c.l.b16 %v594
        %v635 = vunpack.c.l.b16 %v595
        %v636 = vunpack.c.l.b16 %v596
        %v637 = vunpack.c.l.b16 %v597
        %v638 = vunpack.c.l.b16 %v598
        %v639 = vunpack.c.l.b16 %v599
        %v640 = vpack.c.b16 %v633, %v632
        %v641 = vpack.c.b16 %v635, %v634
        %v642 = vpack.c.b16 %v637, %v636
        %v643 = vpack.c.b16 %v639, %v638
        %vm648 = vcmask 523264
        %v650 = vsel %vm648, %v620, 0
        %v653 = vsel %vm648, %v621, 0
        %v656 = vsel %vm648, %v622, 0
        %v659 = vsel %vm648, %v623, 0
        %661 = vmatpush.bf16.msra.mxu0 0
        %662 = vmatpush.bf16.msra.mxu0 0
        %663 = vmatpush.bf16.msra.mxu0 0
        %664 = vmatpush.bf16.msra.mxu0 0
        %665 = vmatpush.bf16.msra.mxu0 %v643
        %666 = vmatpush.bf16.msra.mxu0 %v642
        %667 = vmatpush.bf16.msra.mxu0 %v641
        %668 = vmatpush.bf16.msra.mxu0 %v640
        %669 = vmatmul.bf16.gmra.mxu0 %v650
        %v670 = vpop.f32.mrf.mxu0
        %v671 = vadd.f32 %v602, %v670
        %v672 = vpop.f32.mrf.mxu0
        %v673 = vadd.f32 %v602, %v672
        %674 = vmatmul.bf16.gmra.mxu0 %v653
        %v675 = vpop.f32.mrf.mxu0
        %v676 = vadd.f32 %v602, %v675
        %v677 = vpop.f32.mrf.mxu0
        %v678 = vadd.f32 %v602, %v677
        %679 = vmatmul.bf16.gmra.mxu0 %v656
        %v680 = vpop.f32.mrf.mxu0
        %v681 = vadd.f32 %v602, %v680
        %v682 = vpop.f32.mrf.mxu0
        %v683 = vadd.f32 %v602, %v682
        %684 = vmatmul.bf16.gmra.mxu0 %v659
        %v685 = vpop.f32.mrf.mxu0
        %v686 = vadd.f32 %v602, %v685
        %v687 = vpop.f32.mrf.mxu0
        %v688 = vadd.f32 %v602, %v687
        %689 = vdwg.mxu0
        %v690 = vld [vmem:[%s5] sm:$0xf]
        %v691 = vld [vmem:[%s5 + $0x4] sm:$0xf]
        %v692 = vld [vmem:[%s5 + $0x8] sm:$0xf]
        %v693 = vld [vmem:[%s5 + $0xc] sm:$0xf]
        %v694 = vld [vmem:[%s5 + $0x10] sm:$0xf]
        %v695 = vld [vmem:[%s5 + $0x14] sm:$0xf]
        %v696 = vld [vmem:[%s5 + $0x18] sm:$0xf]
        %v697 = vld [vmem:[%s5 + $0x1c] sm:$0xf]
        %v698 = vld [vmem:[%s6] sm:$0x1]
        %v700 = vperm.slane %v698, 0
        %v710 = vunpack.c.l.b16 %v576
        %v711 = vunpack.c.l.b16 %v577
        %v712 = vunpack.c.l.b16 %v578
        %v713 = vunpack.c.l.b16 %v579
        %v714 = vunpack.c.l.b16 %v580
        %v715 = vunpack.c.l.b16 %v581
        %v716 = vunpack.c.l.b16 %v582
        %v717 = vunpack.c.l.b16 %v583
        %v718 = vpack.c.b16 %v711, %v710
        %v719 = vpack.c.b16 %v713, %v712
        %v720 = vpack.c.b16 %v715, %v714
        %v721 = vpack.c.b16 %v717, %v716
        %v730 = vunpack.c.l.b16 %v690
        %v731 = vunpack.c.l.b16 %v691
        %v732 = vunpack.c.l.b16 %v692
        %v733 = vunpack.c.l.b16 %v693
        %v734 = vunpack.c.l.b16 %v694
        %v735 = vunpack.c.l.b16 %v695
        %v736 = vunpack.c.l.b16 %v696
        %v737 = vunpack.c.l.b16 %v697
        %v738 = vpack.c.b16 %v731, %v730
        %v739 = vpack.c.b16 %v733, %v732
        %v740 = vpack.c.b16 %v735, %v734
        %v741 = vpack.c.b16 %v737, %v736
        %v747 = vsel %vm648, %v718, 0
        %v750 = vsel %vm648, %v719, 0
        %v753 = vsel %vm648, %v720, 0
        %v756 = vsel %vm648, %v721, 0
        %758 = vmatpush.bf16.msra.mxu0 0
        %759 = vmatpush.bf16.msra.mxu0 0
        %760 = vmatpush.bf16.msra.mxu0 0
        %761 = vmatpush.bf16.msra.mxu0 0
        %762 = vmatpush.bf16.msra.mxu0 %v741
        %763 = vmatpush.bf16.msra.mxu0 %v740
        %764 = vmatpush.bf16.msra.mxu0 %v739
        %765 = vmatpush.bf16.msra.mxu0 %v738
        %766 = vmatmul.bf16.gmra.mxu0 %v747
        %v767 = vpop.f32.mrf.mxu0
        %v768 = vadd.f32 %v700, %v767
        %v769 = vpop.f32.mrf.mxu0
        %v770 = vadd.f32 %v700, %v769
        %771 = vmatmul.bf16.gmra.mxu0 %v750
        %v772 = vpop.f32.mrf.mxu0
        %v773 = vadd.f32 %v700, %v772
        %v774 = vpop.f32.mrf.mxu0
        %v775 = vadd.f32 %v700, %v774
        %776 = vmatmul.bf16.gmra.mxu0 %v753
        %v777 = vpop.f32.mrf.mxu0
        %v778 = vadd.f32 %v700, %v777
        %v779 = vpop.f32.mrf.mxu0
        %v780 = vadd.f32 %v700, %v779
        %781 = vmatmul.bf16.gmra.mxu0 %v756
        %v782 = vpop.f32.mrf.mxu0
        %v783 = vadd.f32 %v700, %v782
        %v784 = vpop.f32.mrf.mxu0
        %v785 = vadd.f32 %v700, %v784
        %786 = vdwg.mxu0
        %v787 = vld [vmem:[#allocation2] sm:$0xf]
        %v788 = vld [vmem:[#allocation2 + $0x4] sm:$0xf]
        %v789 = vld [vmem:[#allocation2 + $0x8] sm:$0xf]
        %v790 = vld [vmem:[#allocation2 + $0xc] sm:$0xf]
        %v791 = vld [vmem:[#allocation2 + $0x10] sm:$0xf]
        %v792 = vld [vmem:[#allocation2 + $0x14] sm:$0xf]
        %v793 = vld [vmem:[#allocation2 + $0x18] sm:$0xf]
        %v794 = vld [vmem:[#allocation2 + $0x1c] sm:$0xf]
        %v795 = vld [vmem:[%s8] sm:$0x1]
        %v797 = vperm.slane %v795, 0
        %v807 = vunpack.c.l.b16 %v584
        %v808 = vunpack.c.l.b16 %v585
        %v809 = vunpack.c.l.b16 %v586
        %v810 = vunpack.c.l.b16 %v587
        %v811 = vunpack.c.l.b16 %v588
        %v812 = vunpack.c.l.b16 %v589
        %v813 = vunpack.c.l.b16 %v590
        %v814 = vunpack.c.l.b16 %v591
        %v815 = vpack.c.b16 %v808, %v807
        %v816 = vpack.c.b16 %v810, %v809
        %v817 = vpack.c.b16 %v812, %v811
        %v818 = vpack.c.b16 %v814, %v813
        %v827 = vunpack.c.l.b16 %v787
        %v828 = vunpack.c.l.b16 %v788
        %v829 = vunpack.c.l.b16 %v789
        %v830 = vunpack.c.l.b16 %v790
        %v831 = vunpack.c.l.b16 %v791
        %v832 = vunpack.c.l.b16 %v792
        %v833 = vunpack.c.l.b16 %v793
        %v834 = vunpack.c.l.b16 %v794
        %v835 = vpack.c.b16 %v828, %v827
        %v836 = vpack.c.b16 %v830, %v829
        %v837 = vpack.c.b16 %v832, %v831
        %v838 = vpack.c.b16 %v834, %v833
        %v844 = vsel %vm648, %v815, 0
        %v847 = vsel %vm648, %v816, 0
        %v850 = vsel %vm648, %v817, 0
        %v853 = vsel %vm648, %v818, 0
        %855 = vmatpush.bf16.msra.mxu0 0
        %856 = vmatpush.bf16.msra.mxu0 0
        %857 = vmatpush.bf16.msra.mxu0 0
        %858 = vmatpush.bf16.msra.mxu0 0
        %859 = vmatpush.bf16.msra.mxu0 %v838
        %860 = vmatpush.bf16.msra.mxu0 %v837
        %861 = vmatpush.bf16.msra.mxu0 %v836
        %862 = vmatpush.bf16.msra.mxu0 %v835
        %863 = vmatmul.bf16.gmra.mxu0 %v844
        %v864 = vpop.f32.mrf.mxu0
        %v865 = vadd.f32 %v797, %v864
        %v866 = vpop.f32.mrf.mxu0
        %v867 = vadd.f32 %v797, %v866
        %868 = vmatmul.bf16.gmra.mxu0 %v847
        %v869 = vpop.f32.mrf.mxu0
        %v870 = vadd.f32 %v797, %v869
        %v871 = vpop.f32.mrf.mxu0
        %v872 = vadd.f32 %v797, %v871
        %873 = vmatmul.bf16.gmra.mxu0 %v850
        %v874 = vpop.f32.mrf.mxu0
        %v875 = vadd.f32 %v797, %v874
        %v876 = vpop.f32.mrf.mxu0
        %v877 = vadd.f32 %v797, %v876
        %878 = vmatmul.bf16.gmra.mxu0 %v853
        %v879 = vpop.f32.mrf.mxu0
        %v880 = vadd.f32 %v797, %v879
        %v881 = vpop.f32.mrf.mxu0
        %v882 = vadd.f32 %v797, %v881
        %883 = vdwg.mxu0
        %v884 = vld [vmem:[%s11] sm:$0xff]
        %v885 = vld [vmem:[%s11 + $0x8] sm:$0xff]
        %v886 = vld [vmem:[%s11 + $0x10] sm:$0xff]
        %v887 = vld [vmem:[%s11 + $0x18] sm:$0xff]
        %v888 = vld [vmem:[%s11 + $0x20] sm:$0xff]
        %v889 = vld [vmem:[%s11 + $0x28] sm:$0xff]
        %v890 = vld [vmem:[%s11 + $0x30] sm:$0xff]
        %v891 = vld [vmem:[%s11 + $0x38] sm:$0xff]
        %v892 = vld [vmem:[%s12] sm:$0xff]
        %v893 = vld [vmem:[%s12 + $0x8] sm:$0xff]
        %v894 = vld [vmem:[%s12 + $0x10] sm:$0xff]
        %v895 = vld [vmem:[%s12 + $0x18] sm:$0xff]
        %v896 = vld [vmem:[%s12 + $0x20] sm:$0xff]
        %v897 = vld [vmem:[%s12 + $0x28] sm:$0xff]
        %v898 = vld [vmem:[%s12 + $0x30] sm:$0xff]
        %v899 = vld [vmem:[%s12 + $0x38] sm:$0xff]
        %v900 = vld [vmem:[%s13] sm:$0xff]
        %v901 = vld [vmem:[%s13 + $0x8] sm:$0xff]
        %v902 = vld [vmem:[%s13 + $0x10] sm:$0xff]
        %v903 = vld [vmem:[%s13 + $0x18] sm:$0xff]
        %v904 = vld [vmem:[%s13 + $0x20] sm:$0xff]
        %v905 = vld [vmem:[%s13 + $0x28] sm:$0xff]
        %v906 = vld [vmem:[%s13 + $0x30] sm:$0xff]
        %v907 = vld [vmem:[%s13 + $0x38] sm:$0xff]
        %v908 = vld [vmem:[%s14] sm:$0xff]
        %v909 = vld [vmem:[%s14 + $0x8] sm:$0xff]
        %v910 = vld [vmem:[%s14 + $0x10] sm:$0xff]
        %v911 = vld [vmem:[%s14 + $0x18] sm:$0xff]
        %v912 = vld [vmem:[%s14 + $0x20] sm:$0xff]
        %v913 = vld [vmem:[%s14 + $0x28] sm:$0xff]
        %v914 = vld [vmem:[%s14 + $0x30] sm:$0xff]
        %v915 = vld [vmem:[%s14 + $0x38] sm:$0xff]
        %v916 = vmul.f32 %v671, %v884
        %v917 = vmul.f32 %v673, %v885
        %v918 = vmul.f32 %v676, %v886
        %v919 = vmul.f32 %v678, %v887
        %v920 = vmul.f32 %v681, %v888
        %v921 = vmul.f32 %v683, %v889
        %v922 = vmul.f32 %v686, %v890
        %v923 = vmul.f32 %v688, %v891
        %932 = vrot.lane.b32.xlu0 %v892, 16
        %v933 = vpop.permute.xlu0 %932
        %934 = vrot.lane.b32.xlu0 %v893, 16
        %v935 = vpop.permute.xlu0 %934
        %936 = vrot.lane.b32.xlu0 %v894, 16
        %v937 = vpop.permute.xlu0 %936
        %938 = vrot.lane.b32.xlu0 %v895, 16
        %v939 = vpop.permute.xlu0 %938
        %940 = vrot.lane.b32.xlu0 %v896, 16
        %v941 = vpop.permute.xlu0 %940
        %942 = vrot.lane.b32.xlu0 %v897, 16
        %v943 = vpop.permute.xlu0 %942
        %944 = vrot.lane.b32.xlu0 %v898, 16
        %v945 = vpop.permute.xlu0 %944
        %946 = vrot.lane.b32.xlu0 %v899, 16
        %v947 = vpop.permute.xlu0 %946
        %v956 = vmul.f32 %v671, %v933
        %v957 = vmul.f32 %v673, %v935
        %v958 = vmul.f32 %v676, %v937
        %v959 = vmul.f32 %v678, %v939
        %v960 = vmul.f32 %v681, %v941
        %v961 = vmul.f32 %v683, %v943
        %v962 = vmul.f32 %v686, %v945
        %v963 = vmul.f32 %v688, %v947
        %972 = vrot.lane.b32.xlu0 %v956, 112
        %v973 = vpop.permute.xlu0 %972
        %974 = vrot.lane.b32.xlu0 %v957, 112
        %v975 = vpop.permute.xlu0 %974
        %976 = vrot.lane.b32.xlu0 %v958, 112
        %v977 = vpop.permute.xlu0 %976
        %978 = vrot.lane.b32.xlu0 %v959, 112
        %v979 = vpop.permute.xlu0 %978
        %980 = vrot.lane.b32.xlu0 %v960, 112
        %v981 = vpop.permute.xlu0 %980
        %982 = vrot.lane.b32.xlu0 %v961, 112
        %v983 = vpop.permute.xlu0 %982
        %984 = vrot.lane.b32.xlu0 %v962, 112
        %v985 = vpop.permute.xlu0 %984
        %986 = vrot.lane.b32.xlu0 %v963, 112
        %v987 = vpop.permute.xlu0 %986
        %v996 = vsub.f32 %v916, %v973
        %v997 = vsub.f32 %v917, %v975
        %v998 = vsub.f32 %v918, %v977
        %v999 = vsub.f32 %v919, %v979
        %v1000 = vsub.f32 %v920, %v981
        %v1001 = vsub.f32 %v921, %v983
        %v1002 = vsub.f32 %v922, %v985
        %v1003 = vsub.f32 %v923, %v987
        %1012 = vrot.lane.b32.xlu0 %v884, 16
        %v1013 = vpop.permute.xlu0 %1012
        %1014 = vrot.lane.b32.xlu0 %v885, 16
        %v1015 = vpop.permute.xlu0 %1014
        %1016 = vrot.lane.b32.xlu0 %v886, 16
        %v1017 = vpop.permute.xlu0 %1016
        %1018 = vrot.lane.b32.xlu0 %v887, 16
        %v1019 = vpop.permute.xlu0 %1018
        %1020 = vrot.lane.b32.xlu0 %v888, 16
        %v1021 = vpop.permute.xlu0 %1020
        %1022 = vrot.lane.b32.xlu0 %v889, 16
        %v1023 = vpop.permute.xlu0 %1022
        %1024 = vrot.lane.b32.xlu0 %v890, 16
        %v1025 = vpop.permute.xlu0 %1024
        %1026 = vrot.lane.b32.xlu0 %v891, 16
        %v1027 = vpop.permute.xlu0 %1026
        %v1036 = vmul.f32 %v671, %v1013
        %v1037 = vmul.f32 %v673, %v1015
        %v1038 = vmul.f32 %v676, %v1017
        %v1039 = vmul.f32 %v678, %v1019
        %v1040 = vmul.f32 %v681, %v1021
        %v1041 = vmul.f32 %v683, %v1023
        %v1042 = vmul.f32 %v686, %v1025
        %v1043 = vmul.f32 %v688, %v1027
        %v1044 = vmul.f32 %v671, %v892
        %v1045 = vmul.f32 %v673, %v893
        %v1046 = vmul.f32 %v676, %v894
        %v1047 = vmul.f32 %v678, %v895
        %v1048 = vmul.f32 %v681, %v896
        %v1049 = vmul.f32 %v683, %v897
        %v1050 = vmul.f32 %v686, %v898
        %v1051 = vmul.f32 %v688, %v899
        %1060 = vrot.lane.b32.xlu0 %v1044, 16
        %v1061 = vpop.permute.xlu0 %1060
        %1062 = vrot.lane.b32.xlu0 %v1045, 16
        %v1063 = vpop.permute.xlu0 %1062
        %1064 = vrot.lane.b32.xlu0 %v1046, 16
        %v1065 = vpop.permute.xlu0 %1064
        %1066 = vrot.lane.b32.xlu0 %v1047, 16
        %v1067 = vpop.permute.xlu0 %1066
        %1068 = vrot.lane.b32.xlu0 %v1048, 16
        %v1069 = vpop.permute.xlu0 %1068
        %1070 = vrot.lane.b32.xlu0 %v1049, 16
        %v1071 = vpop.permute.xlu0 %1070
        %1072 = vrot.lane.b32.xlu0 %v1050, 16
        %v1073 = vpop.permute.xlu0 %1072
        %1074 = vrot.lane.b32.xlu0 %v1051, 16
        %v1075 = vpop.permute.xlu0 %1074
        %v1084 = vadd.f32 %v1036, %v1061
        %v1085 = vadd.f32 %v1037, %v1063
        %v1086 = vadd.f32 %v1038, %v1065
        %v1087 = vadd.f32 %v1039, %v1067
        %v1088 = vadd.f32 %v1040, %v1069
        %v1089 = vadd.f32 %v1041, %v1071
        %v1090 = vadd.f32 %v1042, %v1073
        %v1091 = vadd.f32 %v1043, %v1075
        %vm1092 = vcmask 130048
        %v1093 = vsel %vm1092, %v996, %v1084
        %v1094 = vsel %vm1092, %v997, %v1085
        %v1095 = vsel %vm1092, %v998, %v1086
        %v1096 = vsel %vm1092, %v999, %v1087
        %v1097 = vsel %vm1092, %v1000, %v1088
        %v1098 = vsel %vm1092, %v1001, %v1089
        %v1099 = vsel %vm1092, %v1002, %v1090
        %v1100 = vsel %vm1092, %v1003, %v1091
        %v1101 = vmul.f32 %v768, %v900
        %v1102 = vmul.f32 %v770, %v901
        %v1103 = vmul.f32 %v773, %v902
        %v1104 = vmul.f32 %v775, %v903
        %v1105 = vmul.f32 %v778, %v904
        %v1106 = vmul.f32 %v780, %v905
        %v1107 = vmul.f32 %v783, %v906
        %v1108 = vmul.f32 %v785, %v907
        %1117 = vrot.lane.b32.xlu0 %v908, 16
        %v1118 = vpop.permute.xlu0 %1117
        %1119 = vrot.lane.b32.xlu0 %v909, 16
        %v1120 = vpop.permute.xlu0 %1119
        %1121 = vrot.lane.b32.xlu0 %v910, 16
        %v1122 = vpop.permute.xlu0 %1121
        %1123 = vrot.lane.b32.xlu0 %v911, 16
        %v1124 = vpop.permute.xlu0 %1123
        %1125 = vrot.lane.b32.xlu0 %v912, 16
        %v1126 = vpop.permute.xlu0 %1125
        %1127 = vrot.lane.b32.xlu0 %v913, 16
        %v1128 = vpop.permute.xlu0 %1127
        %1129 = vrot.lane.b32.xlu0 %v914, 16
        %v1130 = vpop.permute.xlu0 %1129
        %1131 = vrot.lane.b32.xlu0 %v915, 16
        %v1132 = vpop.permute.xlu0 %1131
        %v1141 = vmul.f32 %v768, %v1118
        %v1142 = vmul.f32 %v770, %v1120
        %v1143 = vmul.f32 %v773, %v1122
        %v1144 = vmul.f32 %v775, %v1124
        %v1145 = vmul.f32 %v778, %v1126
        %v1146 = vmul.f32 %v780, %v1128
        %v1147 = vmul.f32 %v783, %v1130
        %v1148 = vmul.f32 %v785, %v1132
        %1157 = vrot.lane.b32.xlu0 %v1141, 112
        %v1158 = vpop.permute.xlu0 %1157
        %1159 = vrot.lane.b32.xlu0 %v1142, 112
        %v1160 = vpop.permute.xlu0 %1159
        %1161 = vrot.lane.b32.xlu0 %v1143, 112
        %v1162 = vpop.permute.xlu0 %1161
        %1163 = vrot.lane.b32.xlu0 %v1144, 112
        %v1164 = vpop.permute.xlu0 %1163
        %1165 = vrot.lane.b32.xlu0 %v1145, 112
        %v1166 = vpop.permute.xlu0 %1165
        %1167 = vrot.lane.b32.xlu0 %v1146, 112
        %v1168 = vpop.permute.xlu0 %1167
        %1169 = vrot.lane.b32.xlu0 %v1147, 112
        %v1170 = vpop.permute.xlu0 %1169
        %1171 = vrot.lane.b32.xlu0 %v1148, 112
        %v1172 = vpop.permute.xlu0 %1171
        %v1181 = vsub.f32 %v1101, %v1158
        %v1182 = vsub.f32 %v1102, %v1160
        %v1183 = vsub.f32 %v1103, %v1162
        %v1184 = vsub.f32 %v1104, %v1164
        %v1185 = vsub.f32 %v1105, %v1166
        %v1186 = vsub.f32 %v1106, %v1168
        %v1187 = vsub.f32 %v1107, %v1170
        %v1188 = vsub.f32 %v1108, %v1172
        %1197 = vrot.lane.b32.xlu0 %v900, 16
        %v1198 = vpop.permute.xlu0 %1197
        %1199 = vrot.lane.b32.xlu0 %v901, 16
        %v1200 = vpop.permute.xlu0 %1199
        %1201 = vrot.lane.b32.xlu0 %v902, 16
        %v1202 = vpop.permute.xlu0 %1201
        %1203 = vrot.lane.b32.xlu0 %v903, 16
        %v1204 = vpop.permute.xlu0 %1203
        %1205 = vrot.lane.b32.xlu0 %v904, 16
        %v1206 = vpop.permute.xlu0 %1205
        %1207 = vrot.lane.b32.xlu0 %v905, 16
        %v1208 = vpop.permute.xlu0 %1207
        %1209 = vrot.lane.b32.xlu0 %v906, 16
        %v1210 = vpop.permute.xlu0 %1209
        %1211 = vrot.lane.b32.xlu0 %v907, 16
        %v1212 = vpop.permute.xlu0 %1211
        %v1221 = vmul.f32 %v768, %v1198
        %v1222 = vmul.f32 %v770, %v1200
        %v1223 = vmul.f32 %v773, %v1202
        %v1224 = vmul.f32 %v775, %v1204
        %v1225 = vmul.f32 %v778, %v1206
        %v1226 = vmul.f32 %v780, %v1208
        %v1227 = vmul.f32 %v783, %v1210
        %v1228 = vmul.f32 %v785, %v1212
        %v1229 = vmul.f32 %v768, %v908
        %v1230 = vmul.f32 %v770, %v909
        %v1231 = vmul.f32 %v773, %v910
        %v1232 = vmul.f32 %v775, %v911
        %v1233 = vmul.f32 %v778, %v912
        %v1234 = vmul.f32 %v780, %v913
        %v1235 = vmul.f32 %v783, %v914
        %v1236 = vmul.f32 %v785, %v915
        %1245 = vrot.lane.b32.xlu0 %v1229, 16
        %v1246 = vpop.permute.xlu0 %1245
        %1247 = vrot.lane.b32.xlu0 %v1230, 16
        %v1248 = vpop.permute.xlu0 %1247
        %1249 = vrot.lane.b32.xlu0 %v1231, 16
        %v1250 = vpop.permute.xlu0 %1249
        %1251 = vrot.lane.b32.xlu0 %v1232, 16
        %v1252 = vpop.permute.xlu0 %1251
        %1253 = vrot.lane.b32.xlu0 %v1233, 16
        %v1254 = vpop.permute.xlu0 %1253
        %1255 = vrot.lane.b32.xlu0 %v1234, 16
        %v1256 = vpop.permute.xlu0 %1255
        %1257 = vrot.lane.b32.xlu0 %v1235, 16
        %v1258 = vpop.permute.xlu0 %1257
        %1259 = vrot.lane.b32.xlu0 %v1236, 16
        %v1260 = vpop.permute.xlu0 %1259
        %v1269 = vadd.f32 %v1221, %v1246
        %v1270 = vadd.f32 %v1222, %v1248
        %v1271 = vadd.f32 %v1223, %v1250
        %v1272 = vadd.f32 %v1224, %v1252
        %v1273 = vadd.f32 %v1225, %v1254
        %v1274 = vadd.f32 %v1226, %v1256
        %v1275 = vadd.f32 %v1227, %v1258
        %v1276 = vadd.f32 %v1228, %v1260
        %v1277 = vsel %vm1092, %v1181, %v1269
        %v1278 = vsel %vm1092, %v1182, %v1270
        %v1279 = vsel %vm1092, %v1183, %v1271
        %v1280 = vsel %vm1092, %v1184, %v1272
        %v1281 = vsel %vm1092, %v1185, %v1273
        %v1282 = vsel %vm1092, %v1186, %v1274
        %v1283 = vsel %vm1092, %v1187, %v1275
        %v1284 = vsel %vm1092, %v1188, %v1276
        %v1285 = vpack.c.bf16 %v1094, %v1093
        %v1286 = vpack.c.bf16 %v1096, %v1095
        %v1287 = vpack.c.bf16 %v1098, %v1097
        %v1288 = vpack.c.bf16 %v1100, %v1099
        %v1289 = vpack.c.bf16 %v1278, %v1277
        %v1290 = vpack.c.bf16 %v1280, %v1279
        %v1291 = vpack.c.bf16 %v1282, %v1281
        %v1292 = vpack.c.bf16 %v1284, %v1283
        %vm1293 = vcmask 261120
        %v1295 = vsel %vm1293, %v1285, 0
        %v1298 = vsel %vm1293, %v1286, 0
        %v1301 = vsel %vm1293, %v1287, 0
        %v1304 = vsel %vm1293, %v1288, 0
        %v1307 = vsel %vm1293, %v1289, 0
        %v1310 = vsel %vm1293, %v1290, 0
        %v1313 = vsel %vm1293, %v1291, 0
        %v1316 = vsel %vm1293, %v1292, 0
        %1318 = vmatpush.bf16.xpose.msra.mxu0 0
        %1319 = vmatpush.bf16.xpose.msra.mxu0 0
        %1320 = vmatpush.bf16.xpose.msra.mxu0 0
        %1321 = vmatpush.bf16.xpose.msra.mxu0 0
        %1322 = vmatpush.bf16.xpose.msra.mxu0 %v1316
        %1323 = vmatpush.bf16.xpose.msra.mxu0 %v1313
        %1324 = vmatpush.bf16.xpose.msra.mxu0 %v1310
        %1325 = vmatpush.bf16.xpose.msra.mxu0 %v1307
        %1326 = vmatmul.bf16.gmra.mxu0 %v1295
        %v1327 = vpop.f32.mrf.mxu0
        %v1328 = vadd.f32 0.0, %v1327
        %v1329 = vpop.f32.mrf.mxu0
        %v1330 = vadd.f32 0.0, %v1329
        %1331 = vmatmul.bf16.gmra.mxu0 %v1298
        %v1332 = vpop.f32.mrf.mxu0
        %v1333 = vadd.f32 0.0, %v1332
        %v1334 = vpop.f32.mrf.mxu0
        %v1335 = vadd.f32 0.0, %v1334
        %1336 = vmatmul.bf16.gmra.mxu0 %v1301
        %v1337 = vpop.f32.mrf.mxu0
        %v1338 = vadd.f32 0.0, %v1337
        %v1339 = vpop.f32.mrf.mxu0
        %v1340 = vadd.f32 0.0, %v1339
        %1341 = vmatmul.bf16.gmra.mxu0 %v1304
        %v1342 = vpop.f32.mrf.mxu0
        %v1343 = vadd.f32 0.0, %v1342
        %v1344 = vpop.f32.mrf.mxu0
        %v1345 = vadd.f32 0.0, %v1344
        %1346 = vdwg.mxu0
        %v1347 = vmul.f32 %v1328, 0.17677669
        %v1348 = vmul.f32 %v1330, 0.17677669
        %v1349 = vmul.f32 %v1333, 0.17677669
        %v1350 = vmul.f32 %v1335, 0.17677669
        %v1351 = vmul.f32 %v1338, 0.17677669
        %v1352 = vmul.f32 %v1340, 0.17677669
        %v1353 = vmul.f32 %v1343, 0.17677669
        %v1354 = vmul.f32 %v1345, 0.17677669
        %v1355 = vsel %vm648, %v1347, -inf
        %1356 = vmax.xlane.f32.xlu0 %v1355
        %v1357 = vpop.xlane.xlu0 %1356
        %v1358 = vsel %vm648, %v1348, -inf
        %1359 = vmax.xlane.f32.xlu0 %v1358
        %v1360 = vpop.xlane.xlu0 %1359
        %v1361 = vsel %vm648, %v1349, -inf
        %1362 = vmax.xlane.f32.xlu0 %v1361
        %v1363 = vpop.xlane.xlu0 %1362
        %v1364 = vsel %vm648, %v1350, -inf
        %1365 = vmax.xlane.f32.xlu0 %v1364
        %v1366 = vpop.xlane.xlu0 %1365
        %v1367 = vsel %vm648, %v1351, -inf
        %1368 = vmax.xlane.f32.xlu0 %v1367
        %v1369 = vpop.xlane.xlu0 %1368
        %v1370 = vsel %vm648, %v1352, -inf
        %1371 = vmax.xlane.f32.xlu0 %v1370
        %v1372 = vpop.xlane.xlu0 %1371
        %v1373 = vsel %vm648, %v1353, -inf
        %1374 = vmax.xlane.f32.xlu0 %v1373
        %v1375 = vpop.xlane.xlu0 %1374
        %v1376 = vsel %vm648, %v1354, -inf
        %1377 = vmax.xlane.f32.xlu0 %v1376
        %v1378 = vpop.xlane.xlu0 %1377
        %v1379 = vsub.f32 %v1347, %v1357
        %v1380 = vsub.f32 %v1348, %v1360
        %v1381 = vsub.f32 %v1349, %v1363
        %v1382 = vsub.f32 %v1350, %v1366
        %v1383 = vsub.f32 %v1351, %v1369
        %v1384 = vsub.f32 %v1352, %v1372
        %v1385 = vsub.f32 %v1353, %v1375
        %v1386 = vsub.f32 %v1354, %v1378
        %v1387 = vmul.f32 %v1379, 1.442695
        %v1388 = vpow.pop %v1387
        %v1389 = vmul.f32 %v1380, 1.442695
        %v1390 = vpow.pop %v1389
        %v1391 = vmul.f32 %v1381, 1.442695
        %v1392 = vpow.pop %v1391
        %v1393 = vmul.f32 %v1382, 1.442695
        %v1394 = vpow.pop %v1393
        %v1395 = vmul.f32 %v1383, 1.442695
        %v1396 = vpow.pop %v1395
        %v1397 = vmul.f32 %v1384, 1.442695
        %v1398 = vpow.pop %v1397
        %v1399 = vmul.f32 %v1385, 1.442695
        %v1400 = vpow.pop %v1399
        %v1401 = vmul.f32 %v1386, 1.442695
        %v1402 = vpow.pop %v1401
        %v1403 = vsel %vm648, %v1388, 0.0
        %1404 = vadd.xlane.f32.xlu0 %v1403
        %v1405 = vpop.xlane.xlu0 %1404
        %v1406 = vsel %vm648, %v1390, 0.0
        %1407 = vadd.xlane.f32.xlu0 %v1406
        %v1408 = vpop.xlane.xlu0 %1407
        %v1409 = vsel %vm648, %v1392, 0.0
        %1410 = vadd.xlane.f32.xlu0 %v1409
        %v1411 = vpop.xlane.xlu0 %1410
        %v1412 = vsel %vm648, %v1394, 0.0
        %1413 = vadd.xlane.f32.xlu0 %v1412
        %v1414 = vpop.xlane.xlu0 %1413
        %v1415 = vsel %vm648, %v1396, 0.0
        %1416 = vadd.xlane.f32.xlu0 %v1415
        %v1417 = vpop.xlane.xlu0 %1416
        %v1418 = vsel %vm648, %v1398, 0.0
        %1419 = vadd.xlane.f32.xlu0 %v1418
        %v1420 = vpop.xlane.xlu0 %1419
        %v1421 = vsel %vm648, %v1400, 0.0
        %1422 = vadd.xlane.f32.xlu0 %v1421
        %v1423 = vpop.xlane.xlu0 %1422
        %v1424 = vsel %vm648, %v1402, 0.0
        %1425 = vadd.xlane.f32.xlu0 %v1424
        %v1426 = vpop.xlane.xlu0 %1425
        %v1427 = vrcp.pop %v1405
        %v1428 = vrcp.pop %v1408
        %v1429 = vrcp.pop %v1411
        %v1430 = vrcp.pop %v1414
        %v1431 = vrcp.pop %v1417
        %v1432 = vrcp.pop %v1420
        %v1433 = vrcp.pop %v1423
        %v1434 = vrcp.pop %v1426
        %v1435 = vmul.f32 %v1388, %v1427
        %v1436 = vmul.f32 %v1390, %v1428
        %v1437 = vmul.f32 %v1392, %v1429
        %v1438 = vmul.f32 %v1394, %v1430
        %v1439 = vmul.f32 %v1396, %v1431
        %v1440 = vmul.f32 %v1398, %v1432
        %v1441 = vmul.f32 %v1400, %v1433
        %v1442 = vmul.f32 %v1402, %v1434
        %v1443 = vpack.c.bf16 %v1436, %v1435
        %v1444 = vpack.c.bf16 %v1438, %v1437
        %v1445 = vpack.c.bf16 %v1440, %v1439
        %v1446 = vpack.c.bf16 %v1442, %v1441
        %v1447 = vpack.c.bf16 %v867, %v865
        %v1448 = vpack.c.bf16 %v872, %v870
        %v1449 = vpack.c.bf16 %v877, %v875
        %v1450 = vpack.c.bf16 %v882, %v880
        %v1452 = vsel %vm648, %v1443, 0
        %v1455 = vsel %vm648, %v1444, 0
        %v1458 = vsel %vm648, %v1445, 0
        %v1461 = vsel %vm648, %v1446, 0
        %1463 = vmatpush.bf16.msra.mxu0 0
        %1464 = vmatpush.bf16.msra.mxu0 0
        %1465 = vmatpush.bf16.msra.mxu0 0
        %1466 = vmatpush.bf16.msra.mxu0 0
        %1467 = vmatpush.bf16.msra.mxu0 %v1450
        %1468 = vmatpush.bf16.msra.mxu0 %v1449
        %1469 = vmatpush.bf16.msra.mxu0 %v1448
        %1470 = vmatpush.bf16.msra.mxu0 %v1447
        %1471 = vmatmul.bf16.gmra.mxu0 %v1452
        %v1472 = vpop.f32.mrf.mxu0
        %v1473 = vadd.f32 0.0, %v1472
        %v1474 = vpop.f32.mrf.mxu0
        %v1475 = vadd.f32 0.0, %v1474
        %1476 = vmatmul.bf16.gmra.mxu0 %v1455
        %v1477 = vpop.f32.mrf.mxu0
        %v1478 = vadd.f32 0.0, %v1477
        %v1479 = vpop.f32.mrf.mxu0
        %v1480 = vadd.f32 0.0, %v1479
        %1481 = vmatmul.bf16.gmra.mxu0 %v1458
        %v1482 = vpop.f32.mrf.mxu0
        %v1483 = vadd.f32 0.0, %v1482
        %v1484 = vpop.f32.mrf.mxu0
        %v1485 = vadd.f32 0.0, %v1484
        %1486 = vmatmul.bf16.gmra.mxu0 %v1461
        %v1487 = vpop.f32.mrf.mxu0
        %v1488 = vadd.f32 0.0, %v1487
        %v1489 = vpop.f32.mrf.mxu0
        %v1490 = vadd.f32 0.0, %v1489
        %1491 = vdwg.mxu0
        %1492 = vrot.lane.b32.xlu0 %v884, 32
        %v1493 = vpop.permute.xlu0 %1492
        %1494 = vrot.lane.b32.xlu0 %v885, 32
        %v1495 = vpop.permute.xlu0 %1494
        %1496 = vrot.lane.b32.xlu0 %v886, 32
        %v1497 = vpop.permute.xlu0 %1496
        %1498 = vrot.lane.b32.xlu0 %v887, 32
        %v1499 = vpop.permute.xlu0 %1498
        %1500 = vrot.lane.b32.xlu0 %v888, 32
        %v1501 = vpop.permute.xlu0 %1500
        %1502 = vrot.lane.b32.xlu0 %v889, 32
        %v1503 = vpop.permute.xlu0 %1502
        %1504 = vrot.lane.b32.xlu0 %v890, 32
        %v1505 = vpop.permute.xlu0 %1504
        %1506 = vrot.lane.b32.xlu0 %v891, 32
        %v1507 = vpop.permute.xlu0 %1506
        %v1516 = vmul.f32 %v671, %v1493
        %v1517 = vmul.f32 %v673, %v1495
        %v1518 = vmul.f32 %v676, %v1497
        %v1519 = vmul.f32 %v678, %v1499
        %v1520 = vmul.f32 %v681, %v1501
        %v1521 = vmul.f32 %v683, %v1503
        %v1522 = vmul.f32 %v686, %v1505
        %v1523 = vmul.f32 %v688, %v1507
        %1524 = vrot.lane.b32.xlu0 %v892, 48
        %v1525 = vpop.permute.xlu0 %1524
        %1526 = vrot.lane.b32.xlu0 %v893, 48
        %v1527 = vpop.permute.xlu0 %1526
        %1528 = vrot.lane.b32.xlu0 %v894, 48
        %v1529 = vpop.permute.xlu0 %1528
        %1530 = vrot.lane.b32.xlu0 %v895, 48
        %v1531 = vpop.permute.xlu0 %1530
        %1532 = vrot.lane.b32.xlu0 %v896, 48
        %v1533 = vpop.permute.xlu0 %1532
        %1534 = vrot.lane.b32.xlu0 %v897, 48
        %v1535 = vpop.permute.xlu0 %1534
        %1536 = vrot.lane.b32.xlu0 %v898, 48
        %v1537 = vpop.permute.xlu0 %1536
        %1538 = vrot.lane.b32.xlu0 %v899, 48
        %v1539 = vpop.permute.xlu0 %1538
        %v1548 = vmul.f32 %v671, %v1525
        %v1549 = vmul.f32 %v673, %v1527
        %v1550 = vmul.f32 %v676, %v1529
        %v1551 = vmul.f32 %v678, %v1531
        %v1552 = vmul.f32 %v681, %v1533
        %v1553 = vmul.f32 %v683, %v1535
        %v1554 = vmul.f32 %v686, %v1537
        %v1555 = vmul.f32 %v688, %v1539
        %1564 = vrot.lane.b32.xlu0 %v1548, 112
        %v1565 = vpop.permute.xlu0 %1564
        %1566 = vrot.lane.b32.xlu0 %v1549, 112
        %v1567 = vpop.permute.xlu0 %1566
        %1568 = vrot.lane.b32.xlu0 %v1550, 112
        %v1569 = vpop.permute.xlu0 %1568
        %1570 = vrot.lane.b32.xlu0 %v1551, 112
        %v1571 = vpop.permute.xlu0 %1570
        %1572 = vrot.lane.b32.xlu0 %v1552, 112
        %v1573 = vpop.permute.xlu0 %1572
        %1574 = vrot.lane.b32.xlu0 %v1553, 112
        %v1575 = vpop.permute.xlu0 %1574
        %1576 = vrot.lane.b32.xlu0 %v1554, 112
        %v1577 = vpop.permute.xlu0 %1576
        %1578 = vrot.lane.b32.xlu0 %v1555, 112
        %v1579 = vpop.permute.xlu0 %1578
        %v1588 = vsub.f32 %v1516, %v1565
        %v1589 = vsub.f32 %v1517, %v1567
        %v1590 = vsub.f32 %v1518, %v1569
        %v1591 = vsub.f32 %v1519, %v1571
        %v1592 = vsub.f32 %v1520, %v1573
        %v1593 = vsub.f32 %v1521, %v1575
        %v1594 = vsub.f32 %v1522, %v1577
        %v1595 = vsub.f32 %v1523, %v1579
        %1596 = vrot.lane.b32.xlu0 %v884, 48
        %v1597 = vpop.permute.xlu0 %1596
        %1598 = vrot.lane.b32.xlu0 %v885, 48
        %v1599 = vpop.permute.xlu0 %1598
        %1600 = vrot.lane.b32.xlu0 %v886, 48
        %v1601 = vpop.permute.xlu0 %1600
        %1602 = vrot.lane.b32.xlu0 %v887, 48
        %v1603 = vpop.permute.xlu0 %1602
        %1604 = vrot.lane.b32.xlu0 %v888, 48
        %v1605 = vpop.permute.xlu0 %1604
        %1606 = vrot.lane.b32.xlu0 %v889, 48
        %v1607 = vpop.permute.xlu0 %1606
        %1608 = vrot.lane.b32.xlu0 %v890, 48
        %v1609 = vpop.permute.xlu0 %1608
        %1610 = vrot.lane.b32.xlu0 %v891, 48
        %v1611 = vpop.permute.xlu0 %1610
        %v1620 = vmul.f32 %v671, %v1597
        %v1621 = vmul.f32 %v673, %v1599
        %v1622 = vmul.f32 %v676, %v1601
        %v1623 = vmul.f32 %v678, %v1603
        %v1624 = vmul.f32 %v681, %v1605
        %v1625 = vmul.f32 %v683, %v1607
        %v1626 = vmul.f32 %v686, %v1609
        %v1627 = vmul.f32 %v688, %v1611
        %1628 = vrot.lane.b32.xlu0 %v892, 32
        %v1629 = vpop.permute.xlu0 %1628
        %1630 = vrot.lane.b32.xlu0 %v893, 32
        %v1631 = vpop.permute.xlu0 %1630
        %1632 = vrot.lane.b32.xlu0 %v894, 32
        %v1633 = vpop.permute.xlu0 %1632
        %1634 = vrot.lane.b32.xlu0 %v895, 32
        %v1635 = vpop.permute.xlu0 %1634
        %1636 = vrot.lane.b32.xlu0 %v896, 32
        %v1637 = vpop.permute.xlu0 %1636
        %1638 = vrot.lane.b32.xlu0 %v897, 32
        %v1639 = vpop.permute.xlu0 %1638
        %1640 = vrot.lane.b32.xlu0 %v898, 32
        %v1641 = vpop.permute.xlu0 %1640
        %1642 = vrot.lane.b32.xlu0 %v899, 32
        %v1643 = vpop.permute.xlu0 %1642
        %v1652 = vmul.f32 %v671, %v1629
        %v1653 = vmul.f32 %v673, %v1631
        %v1654 = vmul.f32 %v676, %v1633
        %v1655 = vmul.f32 %v678, %v1635
        %v1656 = vmul.f32 %v681, %v1637
        %v1657 = vmul.f32 %v683, %v1639
        %v1658 = vmul.f32 %v686, %v1641
        %v1659 = vmul.f32 %v688, %v1643
        %1668 = vrot.lane.b32.xlu0 %v1652, 16
        %v1669 = vpop.permute.xlu0 %1668
        %1670 = vrot.lane.b32.xlu0 %v1653, 16
        %v1671 = vpop.permute.xlu0 %1670
        %1672 = vrot.lane.b32.xlu0 %v1654, 16
        %v1673 = vpop.permute.xlu0 %1672
        %1674 = vrot.lane.b32.xlu0 %v1655, 16
        %v1675 = vpop.permute.xlu0 %1674
        %1676 = vrot.lane.b32.xlu0 %v1656, 16
        %v1677 = vpop.permute.xlu0 %1676
        %1678 = vrot.lane.b32.xlu0 %v1657, 16
        %v1679 = vpop.permute.xlu0 %1678
        %1680 = vrot.lane.b32.xlu0 %v1658, 16
        %v1681 = vpop.permute.xlu0 %1680
        %1682 = vrot.lane.b32.xlu0 %v1659, 16
        %v1683 = vpop.permute.xlu0 %1682
        %v1692 = vadd.f32 %v1620, %v1669
        %v1693 = vadd.f32 %v1621, %v1671
        %v1694 = vadd.f32 %v1622, %v1673
        %v1695 = vadd.f32 %v1623, %v1675
        %v1696 = vadd.f32 %v1624, %v1677
        %v1697 = vadd.f32 %v1625, %v1679
        %v1698 = vadd.f32 %v1626, %v1681
        %v1699 = vadd.f32 %v1627, %v1683
        %1708 = vrot.lane.b32.xlu0 %v1588, 96
        %v1709 = vpop.permute.xlu0 %1708
        %1710 = vrot.lane.b32.xlu0 %v1589, 96
        %v1711 = vpop.permute.xlu0 %1710
        %1712 = vrot.lane.b32.xlu0 %v1590, 96
        %v1713 = vpop.permute.xlu0 %1712
        %1714 = vrot.lane.b32.xlu0 %v1591, 96
        %v1715 = vpop.permute.xlu0 %1714
        %1716 = vrot.lane.b32.xlu0 %v1592, 96
        %v1717 = vpop.permute.xlu0 %1716
        %1718 = vrot.lane.b32.xlu0 %v1593, 96
        %v1719 = vpop.permute.xlu0 %1718
        %1720 = vrot.lane.b32.xlu0 %v1594, 96
        %v1721 = vpop.permute.xlu0 %1720
        %1722 = vrot.lane.b32.xlu0 %v1595, 96
        %v1723 = vpop.permute.xlu0 %1722
        %1740 = vrot.lane.b32.xlu0 %v1692, 96
        %v1741 = vpop.permute.xlu0 %1740
        %1742 = vrot.lane.b32.xlu0 %v1693, 96
        %v1743 = vpop.permute.xlu0 %1742
        %1744 = vrot.lane.b32.xlu0 %v1694, 96
        %v1745 = vpop.permute.xlu0 %1744
        %1746 = vrot.lane.b32.xlu0 %v1695, 96
        %v1747 = vpop.permute.xlu0 %1746
        %1748 = vrot.lane.b32.xlu0 %v1696, 96
        %v1749 = vpop.permute.xlu0 %1748
        %1750 = vrot.lane.b32.xlu0 %v1697, 96
        %v1751 = vpop.permute.xlu0 %1750
        %1752 = vrot.lane.b32.xlu0 %v1698, 96
        %v1753 = vpop.permute.xlu0 %1752
        %1754 = vrot.lane.b32.xlu0 %v1699, 96
        %v1755 = vpop.permute.xlu0 %1754
        %v1764 = vsel %vm1092, %v1709, %v1741
        %v1765 = vsel %vm1092, %v1711, %v1743
        %v1766 = vsel %vm1092, %v1713, %v1745
        %v1767 = vsel %vm1092, %v1715, %v1747
        %v1768 = vsel %vm1092, %v1717, %v1749
        %v1769 = vsel %vm1092, %v1719, %v1751
        %v1770 = vsel %vm1092, %v1721, %v1753
        %v1771 = vsel %vm1092, %v1723, %v1755
        %1772 = vrot.lane.b32.xlu0 %v900, 32
        %v1773 = vpop.permute.xlu0 %1772
        %1774 = vrot.lane.b32.xlu0 %v901, 32
        %v1775 = vpop.permute.xlu0 %1774
        %1776 = vrot.lane.b32.xlu0 %v902, 32
        %v1777 = vpop.permute.xlu0 %1776
        %1778 = vrot.lane.b32.xlu0 %v903, 32
        %v1779 = vpop.permute.xlu0 %1778
        %1780 = vrot.lane.b32.xlu0 %v904, 32
        %v1781 = vpop.permute.xlu0 %1780
        %1782 = vrot.lane.b32.xlu0 %v905, 32
        %v1783 = vpop.permute.xlu0 %1782
        %1784 = vrot.lane.b32.xlu0 %v906, 32
        %v1785 = vpop.permute.xlu0 %1784
        %1786 = vrot.lane.b32.xlu0 %v907, 32
        %v1787 = vpop.permute.xlu0 %1786
        %v1796 = vmul.f32 %v768, %v1773
        %v1797 = vmul.f32 %v770, %v1775
        %v1798 = vmul.f32 %v773, %v1777
        %v1799 = vmul.f32 %v775, %v1779
        %v1800 = vmul.f32 %v778, %v1781
        %v1801 = vmul.f32 %v780, %v1783
        %v1802 = vmul.f32 %v783, %v1785
        %v1803 = vmul.f32 %v785, %v1787
        %1804 = vrot.lane.b32.xlu0 %v908, 48
        %v1805 = vpop.permute.xlu0 %1804
        %1806 = vrot.lane.b32.xlu0 %v909, 48
        %v1807 = vpop.permute.xlu0 %1806
        %1808 = vrot.lane.b32.xlu0 %v910, 48
        %v1809 = vpop.permute.xlu0 %1808
        %1810 = vrot.lane.b32.xlu0 %v911, 48
        %v1811 = vpop.permute.xlu0 %1810
        %1812 = vrot.lane.b32.xlu0 %v912, 48
        %v1813 = vpop.permute.xlu0 %1812
        %1814 = vrot.lane.b32.xlu0 %v913, 48
        %v1815 = vpop.permute.xlu0 %1814
        %1816 = vrot.lane.b32.xlu0 %v914, 48
        %v1817 = vpop.permute.xlu0 %1816
        %1818 = vrot.lane.b32.xlu0 %v915, 48
        %v1819 = vpop.permute.xlu0 %1818
        %v1828 = vmul.f32 %v768, %v1805
        %v1829 = vmul.f32 %v770, %v1807
        %v1830 = vmul.f32 %v773, %v1809
        %v1831 = vmul.f32 %v775, %v1811
        %v1832 = vmul.f32 %v778, %v1813
        %v1833 = vmul.f32 %v780, %v1815
        %v1834 = vmul.f32 %v783, %v1817
        %v1835 = vmul.f32 %v785, %v1819
        %1844 = vrot.lane.b32.xlu0 %v1828, 112
        %v1845 = vpop.permute.xlu0 %1844
        %1846 = vrot.lane.b32.xlu0 %v1829, 112
        %v1847 = vpop.permute.xlu0 %1846
        %1848 = vrot.lane.b32.xlu0 %v1830, 112
        %v1849 = vpop.permute.xlu0 %1848
        %1850 = vrot.lane.b32.xlu0 %v1831, 112
        %v1851 = vpop.permute.xlu0 %1850
        %1852 = vrot.lane.b32.xlu0 %v1832, 112
        %v1853 = vpop.permute.xlu0 %1852
        %1854 = vrot.lane.b32.xlu0 %v1833, 112
        %v1855 = vpop.permute.xlu0 %1854
        %1856 = vrot.lane.b32.xlu0 %v1834, 112
        %v1857 = vpop.permute.xlu0 %1856
        %1858 = vrot.lane.b32.xlu0 %v1835, 112
        %v1859 = vpop.permute.xlu0 %1858
        %v1868 = vsub.f32 %v1796, %v1845
        %v1869 = vsub.f32 %v1797, %v1847
        %v1870 = vsub.f32 %v1798, %v1849
        %v1871 = vsub.f32 %v1799, %v1851
        %v1872 = vsub.f32 %v1800, %v1853
        %v1873 = vsub.f32 %v1801, %v1855
        %v1874 = vsub.f32 %v1802, %v1857
        %v1875 = vsub.f32 %v1803, %v1859
        %1876 = vrot.lane.b32.xlu0 %v900, 48
        %v1877 = vpop.permute.xlu0 %1876
        %1878 = vrot.lane.b32.xlu0 %v901, 48
        %v1879 = vpop.permute.xlu0 %1878
        %1880 = vrot.lane.b32.xlu0 %v902, 48
        %v1881 = vpop.permute.xlu0 %1880
        %1882 = vrot.lane.b32.xlu0 %v903, 48
        %v1883 = vpop.permute.xlu0 %1882
        %1884 = vrot.lane.b32.xlu0 %v904, 48
        %v1885 = vpop.permute.xlu0 %1884
        %1886 = vrot.lane.b32.xlu0 %v905, 48
        %v1887 = vpop.permute.xlu0 %1886
        %1888 = vrot.lane.b32.xlu0 %v906, 48
        %v1889 = vpop.permute.xlu0 %1888
        %1890 = vrot.lane.b32.xlu0 %v907, 48
        %v1891 = vpop.permute.xlu0 %1890
        %v1900 = vmul.f32 %v768, %v1877
        %v1901 = vmul.f32 %v770, %v1879
        %v1902 = vmul.f32 %v773, %v1881
        %v1903 = vmul.f32 %v775, %v1883
        %v1904 = vmul.f32 %v778, %v1885
        %v1905 = vmul.f32 %v780, %v1887
        %v1906 = vmul.f32 %v783, %v1889
        %v1907 = vmul.f32 %v785, %v1891
        %1908 = vrot.lane.b32.xlu0 %v908, 32
        %v1909 = vpop.permute.xlu0 %1908
        %1910 = vrot.lane.b32.xlu0 %v909, 32
        %v1911 = vpop.permute.xlu0 %1910
        %1912 = vrot.lane.b32.xlu0 %v910, 32
        %v1913 = vpop.permute.xlu0 %1912
        %1914 = vrot.lane.b32.xlu0 %v911, 32
        %v1915 = vpop.permute.xlu0 %1914
        %1916 = vrot.lane.b32.xlu0 %v912, 32
        %v1917 = vpop.permute.xlu0 %1916
        %1918 = vrot.lane.b32.xlu0 %v913, 32
        %v1919 = vpop.permute.xlu0 %1918
        %1920 = vrot.lane.b32.xlu0 %v914, 32
        %v1921 = vpop.permute.xlu0 %1920
        %1922 = vrot.lane.b32.xlu0 %v915, 32
        %v1923 = vpop.permute.xlu0 %1922
        %v1932 = vmul.f32 %v768, %v1909
        %v1933 = vmul.f32 %v770, %v1911
        %v1934 = vmul.f32 %v773, %v1913
        %v1935 = vmul.f32 %v775, %v1915
        %v1936 = vmul.f32 %v778, %v1917
        %v1937 = vmul.f32 %v780, %v1919
        %v1938 = vmul.f32 %v783, %v1921
        %v1939 = vmul.f32 %v785, %v1923
        %1948 = vrot.lane.b32.xlu0 %v1932, 16
        %v1949 = vpop.permute.xlu0 %1948
        %1950 = vrot.lane.b32.xlu0 %v1933, 16
        %v1951 = vpop.permute.xlu0 %1950
        %1952 = vrot.lane.b32.xlu0 %v1934, 16
        %v1953 = vpop.permute.xlu0 %1952
        %1954 = vrot.lane.b32.xlu0 %v1935, 16
        %v1955 = vpop.permute.xlu0 %1954
        %1956 = vrot.lane.b32.xlu0 %v1936, 16
        %v1957 = vpop.permute.xlu0 %1956
        %1958 = vrot.lane.b32.xlu0 %v1937, 16
        %v1959 = vpop.permute.xlu0 %1958
        %1960 = vrot.lane.b32.xlu0 %v1938, 16
        %v1961 = vpop.permute.xlu0 %1960
        %1962 = vrot.lane.b32.xlu0 %v1939, 16
        %v1963 = vpop.permute.xlu0 %1962
        %v1972 = vadd.f32 %v1900, %v1949
        %v1973 = vadd.f32 %v1901, %v1951
        %v1974 = vadd.f32 %v1902, %v1953
        %v1975 = vadd.f32 %v1903, %v1955
        %v1976 = vadd.f32 %v1904, %v1957
        %v1977 = vadd.f32 %v1905, %v1959
        %v1978 = vadd.f32 %v1906, %v1961
        %v1979 = vadd.f32 %v1907, %v1963
        %1988 = vrot.lane.b32.xlu0 %v1868, 96
        %v1989 = vpop.permute.xlu0 %1988
        %1990 = vrot.lane.b32.xlu0 %v1869, 96
        %v1991 = vpop.permute.xlu0 %1990
        %1992 = vrot.lane.b32.xlu0 %v1870, 96
        %v1993 = vpop.permute.xlu0 %1992
        %1994 = vrot.lane.b32.xlu0 %v1871, 96
        %v1995 = vpop.permute.xlu0 %1994
        %1996 = vrot.lane.b32.xlu0 %v1872, 96
        %v1997 = vpop.permute.xlu0 %1996
        %1998 = vrot.lane.b32.xlu0 %v1873, 96
        %v1999 = vpop.permute.xlu0 %1998
        %2000 = vrot.lane.b32.xlu0 %v1874, 96
        %v2001 = vpop.permute.xlu0 %2000
        %2002 = vrot.lane.b32.xlu0 %v1875, 96
        %v2003 = vpop.permute.xlu0 %2002
        %2020 = vrot.lane.b32.xlu0 %v1972, 96
        %v2021 = vpop.permute.xlu0 %2020
        %2022 = vrot.lane.b32.xlu0 %v1973, 96
        %v2023 = vpop.permute.xlu0 %2022
        %2024 = vrot.lane.b32.xlu0 %v1974, 96
        %v2025 = vpop.permute.xlu0 %2024
        %2026 = vrot.lane.b32.xlu0 %v1975, 96
        %v2027 = vpop.permute.xlu0 %2026
        %2028 = vrot.lane.b32.xlu0 %v1976, 96
        %v2029 = vpop.permute.xlu0 %2028
        %2030 = vrot.lane.b32.xlu0 %v1977, 96
        %v2031 = vpop.permute.xlu0 %2030
        %2032 = vrot.lane.b32.xlu0 %v1978, 96
        %v2033 = vpop.permute.xlu0 %2032
        %2034 = vrot.lane.b32.xlu0 %v1979, 96
        %v2035 = vpop.permute.xlu0 %2034
        %v2044 = vsel %vm1092, %v1989, %v2021
        %v2045 = vsel %vm1092, %v1991, %v2023
        %v2046 = vsel %vm1092, %v1993, %v2025
        %v2047 = vsel %vm1092, %v1995, %v2027
        %v2048 = vsel %vm1092, %v1997, %v2029
        %v2049 = vsel %vm1092, %v1999, %v2031
        %v2050 = vsel %vm1092, %v2001, %v2033
        %v2051 = vsel %vm1092, %v2003, %v2035
        %v2052 = vpack.c.bf16 %v1765, %v1764
        %v2053 = vpack.c.bf16 %v1767, %v1766
        %v2054 = vpack.c.bf16 %v1769, %v1768
        %v2055 = vpack.c.bf16 %v1771, %v1770
        %v2056 = vpack.c.bf16 %v2045, %v2044
        %v2057 = vpack.c.bf16 %v2047, %v2046
        %v2058 = vpack.c.bf16 %v2049, %v2048
        %v2059 = vpack.c.bf16 %v2051, %v2050
        %v2061 = vsel %vm1293, %v2052, 0
        %v2064 = vsel %vm1293, %v2053, 0
        %v2067 = vsel %vm1293, %v2054, 0
        %v2070 = vsel %vm1293, %v2055, 0
        %v2073 = vsel %vm1293, %v2056, 0
        %v2076 = vsel %vm1293, %v2057, 0
        %v2079 = vsel %vm1293, %v2058, 0
        %v2082 = vsel %vm1293, %v2059, 0
        %2084 = vmatpush.bf16.xpose.msra.mxu0 0
        %2085 = vmatpush.bf16.xpose.msra.mxu0 0
        %2086 = vmatpush.bf16.xpose.msra.mxu0 0
        %2087 = vmatpush.bf16.xpose.msra.mxu0 0
        %2088 = vmatpush.bf16.xpose.msra.mxu0 %v2082
        %2089 = vmatpush.bf16.xpose.msra.mxu0 %v2079
        %2090 = vmatpush.bf16.xpose.msra.mxu0 %v2076
        %2091 = vmatpush.bf16.xpose.msra.mxu0 %v2073
        %2092 = vmatmul.bf16.gmra.mxu0 %v2061
        %v2093 = vpop.f32.mrf.mxu0
        %v2094 = vadd.f32 0.0, %v2093
        %v2095 = vpop.f32.mrf.mxu0
        %v2096 = vadd.f32 0.0, %v2095
        %2097 = vmatmul.bf16.gmra.mxu0 %v2064
        %v2098 = vpop.f32.mrf.mxu0
        %v2099 = vadd.f32 0.0, %v2098
        %v2100 = vpop.f32.mrf.mxu0
        %v2101 = vadd.f32 0.0, %v2100
        %2102 = vmatmul.bf16.gmra.mxu0 %v2067
        %v2103 = vpop.f32.mrf.mxu0
        %v2104 = vadd.f32 0.0, %v2103
        %v2105 = vpop.f32.mrf.mxu0
        %v2106 = vadd.f32 0.0, %v2105
        %2107 = vmatmul.bf16.gmra.mxu0 %v2070
        %v2108 = vpop.f32.mrf.mxu0
        %v2109 = vadd.f32 0.0, %v2108
        %v2110 = vpop.f32.mrf.mxu0
        %v2111 = vadd.f32 0.0, %v2110
        %2112 = vdwg.mxu0
        %v2113 = vmul.f32 %v2094, 0.17677669
        %v2114 = vmul.f32 %v2096, 0.17677669
        %v2115 = vmul.f32 %v2099, 0.17677669
        %v2116 = vmul.f32 %v2101, 0.17677669
        %v2117 = vmul.f32 %v2104, 0.17677669
        %v2118 = vmul.f32 %v2106, 0.17677669
        %v2119 = vmul.f32 %v2109, 0.17677669
        %v2120 = vmul.f32 %v2111, 0.17677669
        %v2121 = vsel %vm648, %v2113, -inf
        %2122 = vmax.xlane.f32.xlu0 %v2121
        %v2123 = vpop.xlane.xlu0 %2122
        %v2124 = vsel %vm648, %v2114, -inf
        %2125 = vmax.xlane.f32.xlu0 %v2124
        %v2126 = vpop.xlane.xlu0 %2125
        %v2127 = vsel %vm648, %v2115, -inf
        %2128 = vmax.xlane.f32.xlu0 %v2127
        %v2129 = vpop.xlane.xlu0 %2128
        %v2130 = vsel %vm648, %v2116, -inf
        %2131 = vmax.xlane.f32.xlu0 %v2130
        %v2132 = vpop.xlane.xlu0 %2131
        %v2133 = vsel %vm648, %v2117, -inf
        %2134 = vmax.xlane.f32.xlu0 %v2133
        %v2135 = vpop.xlane.xlu0 %2134
        %v2136 = vsel %vm648, %v2118, -inf
        %2137 = vmax.xlane.f32.xlu0 %v2136
        %v2138 = vpop.xlane.xlu0 %2137
        %v2139 = vsel %vm648, %v2119, -inf
        %2140 = vmax.xlane.f32.xlu0 %v2139
        %v2141 = vpop.xlane.xlu0 %2140
        %v2142 = vsel %vm648, %v2120, -inf
        %2143 = vmax.xlane.f32.xlu0 %v2142
        %v2144 = vpop.xlane.xlu0 %2143
        %v2145 = vsub.f32 %v2113, %v2123
        %v2146 = vsub.f32 %v2114, %v2126
        %v2147 = vsub.f32 %v2115, %v2129
        %v2148 = vsub.f32 %v2116, %v2132
        %v2149 = vsub.f32 %v2117, %v2135
        %v2150 = vsub.f32 %v2118, %v2138
        %v2151 = vsub.f32 %v2119, %v2141
        %v2152 = vsub.f32 %v2120, %v2144
        %v2153 = vmul.f32 %v2145, 1.442695
        %v2154 = vpow.pop %v2153
        %v2155 = vmul.f32 %v2146, 1.442695
        %v2156 = vpow.pop %v2155
        %v2157 = vmul.f32 %v2147, 1.442695
        %v2158 = vpow.pop %v2157
        %v2159 = vmul.f32 %v2148, 1.442695
        %v2160 = vpow.pop %v2159
        %v2161 = vmul.f32 %v2149, 1.442695
        %v2162 = vpow.pop %v2161
        %v2163 = vmul.f32 %v2150, 1.442695
        %v2164 = vpow.pop %v2163
        %v2165 = vmul.f32 %v2151, 1.442695
        %v2166 = vpow.pop %v2165
        %v2167 = vmul.f32 %v2152, 1.442695
        %v2168 = vpow.pop %v2167
        %v2169 = vsel %vm648, %v2154, 0.0
        %2170 = vadd.xlane.f32.xlu0 %v2169
        %v2171 = vpop.xlane.xlu0 %2170
        %v2172 = vsel %vm648, %v2156, 0.0
        %2173 = vadd.xlane.f32.xlu0 %v2172
        %v2174 = vpop.xlane.xlu0 %2173
        %v2175 = vsel %vm648, %v2158, 0.0
        %2176 = vadd.xlane.f32.xlu0 %v2175
        %v2177 = vpop.xlane.xlu0 %2176
        %v2178 = vsel %vm648, %v2160, 0.0
        %2179 = vadd.xlane.f32.xlu0 %v2178
        %v2180 = vpop.xlane.xlu0 %2179
        %v2181 = vsel %vm648, %v2162, 0.0
        %2182 = vadd.xlane.f32.xlu0 %v2181
        %v2183 = vpop.xlane.xlu0 %2182
        %v2184 = vsel %vm648, %v2164, 0.0
        %2185 = vadd.xlane.f32.xlu0 %v2184
        %v2186 = vpop.xlane.xlu0 %2185
        %v2187 = vsel %vm648, %v2166, 0.0
        %2188 = vadd.xlane.f32.xlu0 %v2187
        %v2189 = vpop.xlane.xlu0 %2188
        %v2190 = vsel %vm648, %v2168, 0.0
        %2191 = vadd.xlane.f32.xlu0 %v2190
        %v2192 = vpop.xlane.xlu0 %2191
        %v2193 = vrcp.pop %v2171
        %v2194 = vrcp.pop %v2174
        %v2195 = vrcp.pop %v2177
        %v2196 = vrcp.pop %v2180
        %v2197 = vrcp.pop %v2183
        %v2198 = vrcp.pop %v2186
        %v2199 = vrcp.pop %v2189
        %v2200 = vrcp.pop %v2192
        %v2201 = vmul.f32 %v2154, %v2193
        %v2202 = vmul.f32 %v2156, %v2194
        %v2203 = vmul.f32 %v2158, %v2195
        %v2204 = vmul.f32 %v2160, %v2196
        %v2205 = vmul.f32 %v2162, %v2197
        %v2206 = vmul.f32 %v2164, %v2198
        %v2207 = vmul.f32 %v2166, %v2199
        %v2208 = vmul.f32 %v2168, %v2200
        %v2209 = vpack.c.bf16 %v2202, %v2201
        %v2210 = vpack.c.bf16 %v2204, %v2203
        %v2211 = vpack.c.bf16 %v2206, %v2205
        %v2212 = vpack.c.bf16 %v2208, %v2207
        %2217 = vrot.lane.b32.xlu0 %v1447, 96
        %v2218 = vpop.permute.xlu0 %2217
        %2219 = vrot.lane.b32.xlu0 %v1448, 96
        %v2220 = vpop.permute.xlu0 %2219
        %2221 = vrot.lane.b32.xlu0 %v1449, 96
        %v2222 = vpop.permute.xlu0 %2221
        %2223 = vrot.lane.b32.xlu0 %v1450, 96
        %v2224 = vpop.permute.xlu0 %2223
        %v2230 = vsel %vm648, %v2209, 0
        %v2233 = vsel %vm648, %v2210, 0
        %v2236 = vsel %vm648, %v2211, 0
        %v2239 = vsel %vm648, %v2212, 0
        %2241 = vmatpush.bf16.msra.mxu0 0
        %2242 = vmatpush.bf16.msra.mxu0 0
        %2243 = vmatpush.bf16.msra.mxu0 0
        %2244 = vmatpush.bf16.msra.mxu0 0
        %2245 = vmatpush.bf16.msra.mxu0 %v2224
        %2246 = vmatpush.bf16.msra.mxu0 %v2222
        %2247 = vmatpush.bf16.msra.mxu0 %v2220
        %2248 = vmatpush.bf16.msra.mxu0 %v2218
        %2249 = vmatmul.bf16.gmra.mxu0 %v2230
        %v2250 = vpop.f32.mrf.mxu0
        %v2251 = vadd.f32 0.0, %v2250
        %v2252 = vpop.f32.mrf.mxu0
        %v2253 = vadd.f32 0.0, %v2252
        %2254 = vmatmul.bf16.gmra.mxu0 %v2233
        %v2255 = vpop.f32.mrf.mxu0
        %v2256 = vadd.f32 0.0, %v2255
        %v2257 = vpop.f32.mrf.mxu0
        %v2258 = vadd.f32 0.0, %v2257
        %2259 = vmatmul.bf16.gmra.mxu0 %v2236
        %v2260 = vpop.f32.mrf.mxu0
        %v2261 = vadd.f32 0.0, %v2260
        %v2262 = vpop.f32.mrf.mxu0
        %v2263 = vadd.f32 0.0, %v2262
        %2264 = vmatmul.bf16.gmra.mxu0 %v2239
        %v2265 = vpop.f32.mrf.mxu0
        %v2266 = vadd.f32 0.0, %v2265
        %v2267 = vpop.f32.mrf.mxu0
        %v2268 = vadd.f32 0.0, %v2267
        %2269 = vdwg.mxu0
        %2278 = vrot.lane.b32.xlu0 %v2251, 32
        %v2279 = vpop.permute.xlu0 %2278
        %2280 = vrot.lane.b32.xlu0 %v2253, 32
        %v2281 = vpop.permute.xlu0 %2280
        %2282 = vrot.lane.b32.xlu0 %v2256, 32
        %v2283 = vpop.permute.xlu0 %2282
        %2284 = vrot.lane.b32.xlu0 %v2258, 32
        %v2285 = vpop.permute.xlu0 %2284
        %2286 = vrot.lane.b32.xlu0 %v2261, 32
        %v2287 = vpop.permute.xlu0 %2286
        %2288 = vrot.lane.b32.xlu0 %v2263, 32
        %v2289 = vpop.permute.xlu0 %2288
        %2290 = vrot.lane.b32.xlu0 %v2266, 32
        %v2291 = vpop.permute.xlu0 %2290
        %2292 = vrot.lane.b32.xlu0 %v2268, 32
        %v2293 = vpop.permute.xlu0 %2292
        %v2302 = vsel %vm1293, %v1473, %v2279
        %v2303 = vsel %vm1293, %v1475, %v2281
        %v2304 = vsel %vm1293, %v1478, %v2283
        %v2305 = vsel %vm1293, %v1480, %v2285
        %v2306 = vsel %vm1293, %v1483, %v2287
        %v2307 = vsel %vm1293, %v1485, %v2289
        %v2308 = vsel %vm1293, %v1488, %v2291
        %v2309 = vsel %vm1293, %v1490, %v2293
        %v2310 = vpack.c.bf16 %v2303, %v2302
        %v2311 = vpack.c.bf16 %v2305, %v2304
        %v2312 = vpack.c.bf16 %v2307, %v2306
        %v2313 = vpack.c.bf16 %v2309, %v2308
        %v2314 = vld [vmem:[#allocation5] sm:$0xf]
        %v2315 = vld [vmem:[#allocation5 + $0x4] sm:$0xf]
        %v2316 = vld [vmem:[#allocation5 + $0x8] sm:$0xf]
        %v2317 = vld [vmem:[#allocation5 + $0xc] sm:$0xf]
        %v2318 = vld [vmem:[#allocation5 + $0x10] sm:$0xf]
        %v2319 = vld [vmem:[#allocation5 + $0x14] sm:$0xf]
        %v2320 = vld [vmem:[#allocation5 + $0x18] sm:$0xf]
        %v2321 = vld [vmem:[#allocation5 + $0x1c] sm:$0xf]
        %v2322 = vld [vmem:[%s10] sm:$0x1]
        %v2324 = vperm.slane %v2322, 0
        %v2334 = vunpack.c.l.b16 %v2314
        %v2335 = vunpack.c.l.b16 %v2315
        %v2336 = vunpack.c.l.b16 %v2316
        %v2337 = vunpack.c.l.b16 %v2317
        %v2338 = vunpack.c.l.b16 %v2318
        %v2339 = vunpack.c.l.b16 %v2319
        %v2340 = vunpack.c.l.b16 %v2320
        %v2341 = vunpack.c.l.b16 %v2321
        %v2342 = vpack.c.b16 %v2335, %v2334
        %v2343 = vpack.c.b16 %v2337, %v2336
        %v2344 = vpack.c.b16 %v2339, %v2338
        %v2345 = vpack.c.b16 %v2341, %v2340
        %v2351 = vsel %vm648, %v2310, 0
        %v2354 = vsel %vm648, %v2311, 0
        %v2357 = vsel %vm648, %v2312, 0
        %v2360 = vsel %vm648, %v2313, 0
        %2362 = vmatpush.bf16.msra.mxu0 0
        %2363 = vmatpush.bf16.msra.mxu0 0
        %2364 = vmatpush.bf16.msra.mxu0 0
        %2365 = vmatpush.bf16.msra.mxu0 0
        %2366 = vmatpush.bf16.msra.mxu0 %v2345
        %2367 = vmatpush.bf16.msra.mxu0 %v2344
        %2368 = vmatpush.bf16.msra.mxu0 %v2343
        %2369 = vmatpush.bf16.msra.mxu0 %v2342
        %2370 = vmatmul.bf16.gmra.mxu0 %v2351
        %v2371 = vpop.f32.mrf.mxu0
        %v2372 = vadd.f32 %v2324, %v2371
        %v2373 = vpop.f32.mrf.mxu0
        %v2374 = vadd.f32 %v2324, %v2373
        %2375 = vmatmul.bf16.gmra.mxu0 %v2354
        %v2376 = vpop.f32.mrf.mxu0
        %v2377 = vadd.f32 %v2324, %v2376
        %v2378 = vpop.f32.mrf.mxu0
        %v2379 = vadd.f32 %v2324, %v2378
        %2380 = vmatmul.bf16.gmra.mxu0 %v2357
        %v2381 = vpop.f32.mrf.mxu0
        %v2382 = vadd.f32 %v2324, %v2381
        %v2383 = vpop.f32.mrf.mxu0
        %v2384 = vadd.f32 %v2324, %v2383
        %2385 = vmatmul.bf16.gmra.mxu0 %v2360
        %v2386 = vpop.f32.mrf.mxu0
        %v2387 = vadd.f32 %v2324, %v2386
        %v2388 = vpop.f32.mrf.mxu0
        %v2389 = vadd.f32 %v2324, %v2388
        %2390 = vdwg.mxu0
        %2391 = vst.msk [vmem:[%s551] sm:$0xff] %vm648, %v2372
        %2392 = vst.msk [vmem:[%s551 + $0x8] sm:$0xff] %vm648, %v2374
        %2393 = vst.msk [vmem:[%s551 + $0x10] sm:$0xff] %vm648, %v2377
        %2394 = vst.msk [vmem:[%s551 + $0x18] sm:$0xff] %vm648, %v2379
        %2395 = vst.msk [vmem:[%s551 + $0x20] sm:$0xff] %vm648, %v2382
        %2396 = vst.msk [vmem:[%s551 + $0x28] sm:$0xff] %vm648, %v2384
        %2397 = vst.msk [vmem:[%s551 + $0x30] sm:$0xff] %vm648, %v2387
        %2398 = vst.msk [vmem:[%s551 + $0x38] sm:$0xff] %vm648, %v2389
        %s2399 = sand.u32 %s369, 1
        %s2400 = scalar_lea.sflag [#allocation4], %s2399
        %s2401 = sand.u32 %s369, 1
        %s2402 = smul.addr %s2401, 64
        %s2403 = scalar_lea.vmem [#allocation7], %s2402
        // Predicated region
        $region89: #{tpu_custom_call.1} parent=79 // pred_check
          %p2404 = pneg %p379
        $region90: #{tpu_custom_call.1} parent=79 // pred_check_branch
          %2406 = sbr.rel (%p2404) target = $region92
        $region91: #{tpu_custom_call.1} parent=79 // pred_region
          %2408 = vsyncadd %s2400, 0
          %s2409 = smul.addr %s31, 8
          %s2410 = smul.addr %s2409, 8
          %s2411 = scalar_lea.hbm %s15, %s2410
          %s2412 = sshll.u32 %s2403, 4
          %s2413 = int_to_ptr.vmem [resolvable:$true] %s2412
          %s2414 = sshll.u32 %s2411, 4
          %s2415 = int_to_ptr.hbm [resolvable:$true] %s2414
          %2420 = dma.vmem_to_hbm [thread:$0]  %s2413, 1024, %s2415, %s2400, 128, 128, 8
        $region92: #{tpu_custom_call.1} parent=79 // pred_fallthru
          _
      $region80: #{tpu_custom_call.1} parent=5 // pred_fallthru
        _
      %p2421 = scmp.le.s32.totalorder 2, %s26
      // Predicated region
      $region93: #{tpu_custom_call.1} parent=5 // pred_check
        %p2422 = pneg %p2421
      $region94: #{tpu_custom_call.1} parent=5 // pred_check_branch
        %2424 = sbr.rel (%p2422) target = $region96
      $region95: #{tpu_custom_call.1} parent=5 // pred_region
        %s2425 = ssub.s32 %s26, 2
        // Predicated region
        $region97: #{tpu_custom_call.1} parent=95 // pred_check
          %p2426 = pneg %p385
        $region98: #{tpu_custom_call.1} parent=95 // pred_check_branch
          %2428 = sbr.rel (%p2426) target = $region100
        $region99: #{tpu_custom_call.1} parent=95 // pred_region
          %s2429 = sand.u32 %s370, 1
          %s2430 = scalar_lea.sflag [#allocation4], %s2429
          %s2431 = sand.u32 %s370, 1
          %s2432 = smul.addr %s2431, 64
          %s2433 = scalar_lea.vmem [#allocation7], %s2432
          %2435 = dma.done %s2430, 1024
        $region100: #{tpu_custom_call.1} parent=95 // pred_fallthru
          _
      $region96: #{tpu_custom_call.1} parent=5 // pred_fallthru
        _
    $region6: #{tpu_custom_call.1} parent=1 // loop_footer
      %s30 = sadd.s32 1, %s26
    $region7: #{tpu_custom_call.1} parent=1 // loop_footer_branch
      %25 = sbr.rel target = $region3
    $region8: #{tpu_custom_call.1} parent=1 // loop_exit
      _
    %2436 = vsyncpa [#allocation3], 1
    %s2437 = scalar_lea.sflag [#allocation3], 1
    %2438 = vsyncpa %s2437, 1
    %2439 = vsyncpa [#allocation6], 1
    %2440 = vsyncpa [#allocation4], 1
    %s2441 = scalar_lea.sflag [#allocation4], 1
    %2442 = vsyncpa %s2441, 1

</llo_original>
